<compile_context>
chip_gen: v7x
topology: tpu7x:2x2x1
jax: 0.10.0
libtpu: 0.0.40
codegen_flags: <defaults>
</compile_context>

<pallas_src>
import jax
import jax.numpy as jnp
from jax import lax
from jax.experimental import pallas as pl
from jax.experimental.pallas import tpu as pltpu


def _round_up(x, m):
    return (x + m - 1) // m * m


# ---------------- Kernel 1: sampler + highway + LSTM input projection ----------------
def frontend_kernel(x_ref, ws_ref, bs_ref,
                    wtg1_ref, btg1_ref, wtg2_ref, btg2_ref,
                    wih_ref, bih_ref, gx_ref):
    # x rows (TN, word_vec) bf16 -> gate pre-activations (TN, 8*Hdp) f32.
    x = x_ref[...]

    # sampler: Linear(word_vec -> hidden); bf16 operands, f32 accumulation.
    h = jnp.dot(x, ws_ref[...], preferred_element_type=jnp.float32) + bs_ref[...]

    # two highway layers, each a single fused [transform | gate] matmul.
    for wtg_ref, btg_ref in ((wtg1_ref, btg1_ref), (wtg2_ref, btg2_ref)):
        z = jnp.dot(h.astype(jnp.bfloat16), wtg_ref[...],
                    preferred_element_type=jnp.float32) + btg_ref[...]
        H = z.shape[-1] // 2
        t = jax.nn.relu(z[:, :H])
        g = jax.nn.sigmoid(z[:, H:])
        h = g * t + (1.0 - g) * h

    # LSTM input projection for BOTH directions, hoisted out of the recurrence.
    # column groups (width Hdp each): [i_f, i_b, f_f, f_b, o_f, o_b, g_f, g_b]
    gx_ref[...] = (jnp.dot(h.astype(jnp.bfloat16), wih_ref[...],
                           preferred_element_type=jnp.float32) + bih_ref[...])


def frontend(x_rows, pk):
    # x_rows: (N, word_vec) bf16 -> (N, 8*Hdp) f32 gate pre-activations.
    N, D = x_rows.shape
    G = pk["wih"].shape[1]                        # 8 * Hdp
    TN = min(512, _round_up(N, 16))               # bf16-sublane aligned row tile
    Np = _round_up(N, TN)
    if Np // TN < 2:
        # cap the tile so the "parallel" grid axis has >=2 steps (v7x: 2 TCs).
        TN = max(16, _round_up((Np + 1) // 2, 16))
        Np = _round_up(N, TN)
    if Np != N:
        x_rows = jnp.pad(x_rows, ((0, Np - N), (0, 0)))

    const = lambda shape: pl.BlockSpec(shape, lambda i: (0,) * len(shape))
    out = pl.pallas_call(
        frontend_kernel,
        out_shape=jax.ShapeDtypeStruct((Np, G), jnp.float32),
        grid=(Np // TN,),
        in_specs=[
            pl.BlockSpec((TN, D), lambda i: (i, 0)),
            const(pk["ws"].shape), const(pk["bs"].shape),
            const(pk["wtg1"].shape), const(pk["btg1"].shape),
            const(pk["wtg2"].shape), const(pk["btg2"].shape),
            const(pk["wih"].shape), const(pk["bih"].shape),
        ],
        out_specs=pl.BlockSpec((TN, G), lambda i: (i, 0)),
        compiler_params=pltpu.CompilerParams(
            dimension_semantics=("parallel",)),
    )(x_rows, pk["ws"], pk["bs"], pk["wtg1"], pk["btg1"],
      pk["wtg2"], pk["btg2"], pk["wih"], pk["bih"])
    return out[:N]


# ---------- Kernel 2: time-blocked bidirectional LSTM (fused block-diag W_hh) ----------
def bilstm_kernel(gx_ref, whh_ref, out_ref, h_ref, c_ref):
    # gx_ref : (tchunk, B, 8*Hdp) f32, time-major, bwd direction pre-reversed
    # whh_ref: (2*Hdp, 8*Hdp) bf16 block-diagonal [W_hh_f ; W_hh_b]
    # out_ref: (tchunk, B, 2*Hdp) f32, [h_f | h_b] per recurrence step
    Tcb, B, G = gx_ref.shape
    Hdp = G // 8
    Hd2 = 2 * Hdp

    # reset the carried state at the first time-chunk of each sequence
    @pl.when(pl.program_id(1) == 0)
    def _():
        h_ref[...] = jnp.zeros_like(h_ref)
        c_ref[...] = jnp.zeros_like(c_ref)

    whh = whh_ref[...]                     # resident for the whole chunk
    h0 = h_ref[...]
    c0 = c_ref[...]

    def step(t, carry):
        h, c = carry
        gx_t = gx_ref[t]                   # (B, 8*Hdp) leading-axis view
        gates = gx_t + jnp.dot(h.astype(jnp.bfloat16), whh,
                               preferred_element_type=jnp.float32)
        # one sigmoid over [i_f,i_b,f_f,f_b,o_f,o_b], one tanh over [g_f,g_b]
        sg = jax.nn.sigmoid(gates[:, :6 * Hdp])
        g_cat = jnp.tanh(gates[:, 6 * Hdp:])
        i_cat = sg[:, 0:Hd2]
        f_cat = sg[:, Hd2:2 * Hd2]
        o_cat = sg[:, 2 * Hd2:3 * Hd2]
        c_new = f_cat * c + i_cat * g_cat
        h_new = o_cat * jnp.tanh(c_new)
        out_ref[t] = h_new                 # chunk-local VMEM store; HBM DMA per chunk
        return h_new, c_new

    h_fin, c_fin = lax.fori_loop(0, Tcb, step, (h0, c0), unroll=min(8, Tcb))
    h_ref[...] = h_fin
    c_ref[...] = c_fin


def bilstm(gx_all, whh_bd, tchunk):
    # gx_all: (2, T_pad, B, 8*Hdp) f32; whh_bd: (2*Hdp, 8*Hdp) bf16
    S, Tp, B, G = gx_all.shape
    Hdp = G // 8
    nc = Tp // tchunk
    return pl.pallas_call(
        bilstm_kernel,
        out_shape=jax.ShapeDtypeStruct((S, Tp, B, 2 * Hdp), jnp.float32),
        grid=(S, nc),
        in_specs=[
            pl.BlockSpec((None, tchunk, B, G), lambda s, c: (s, c, 0, 0)),
            pl.BlockSpec((2 * Hdp, G), lambda s, c: (0, 0)),
        ],
        out_specs=pl.BlockSpec((None, tchunk, B, 2 * Hdp),
                               lambda s, c: (s, c, 0, 0)),
        scratch_shapes=[pltpu.VMEM((B, 2 * Hdp), jnp.float32),   # h = [h_f | h_b]
                        pltpu.VMEM((B, 2 * Hdp), jnp.float32)],  # c = [c_f | c_b]
        compiler_params=pltpu.CompilerParams(
            dimension_semantics=("parallel", "arbitrary")),
    )(gx_all, whh_bd)


# --------------------------------- weight packing ----------------------------------
def _split_gates(w, Hd):
    # last dim is 4*Hd in (i, f, g, o) order
    return {"i": w[..., 0 * Hd:1 * Hd], "f": w[..., 1 * Hd:2 * Hd],
            "g": w[..., 2 * Hd:3 * Hd], "o": w[..., 3 * Hd:4 * Hd]}


def _pack_gate_cols(w_f, w_b, Hd, Hdp):
    # -> last dim 8*Hdp, groups [i_f, i_b, f_f, f_b, o_f, o_b, g_f, g_b]
    gf, gb = _split_gates(w_f, Hd), _split_gates(w_b, Hd)
    pad = lambda a: jnp.pad(a, [(0, 0)] * (a.ndim - 1) + [(0, Hdp - Hd)])
    pieces = []
    for name in ("i", "f", "o", "g"):          # sigmoid gates first, tanh last
        pieces.append(pad(gf[name]))
        pieces.append(pad(gb[name]))
    return jnp.concatenate(pieces, axis=-1)


def _pack_params(params, Hd, Hdp):
    bf16 = lambda a: a.astype(jnp.bfloat16)
    wih = _pack_gate_cols(params["wih_f"], params["wih_b"], Hd, Hdp)
    bih = _pack_gate_cols(params["b_f"], params["b_b"], Hd, Hdp)
    zf = jnp.zeros_like(params["whh_f"])
    zb = jnp.zeros_like(params["whh_b"])
    whh_f_cols = _pack_gate_cols(params["whh_f"], zb, Hd, Hdp)   # bwd cols zero
    whh_b_cols = _pack_gate_cols(zf, params["whh_b"], Hd, Hdp)   # fwd cols zero
    pad_rows = lambda a: jnp.pad(a, ((0, Hdp - Hd), (0, 0)))
    whh_bd = jnp.concatenate([pad_rows(whh_f_cols), pad_rows(whh_b_cols)], axis=0)
    return {
        "ws": bf16(params["ws"]), "bs": params["bs"],
        "wtg1": bf16(jnp.concatenate([params["wt1"], params["wg1"]], axis=1)),
        "btg1": jnp.concatenate([params["bt1"], params["bg1"]], axis=1),
        "wtg2": bf16(jnp.concatenate([params["wt2"], params["wg2"]], axis=1)),
        "btg2": jnp.concatenate([params["bt2"], params["bg2"]], axis=1),
        "wih": bf16(wih), "bih": bih,
        "whh_bd": bf16(whh_bd),
    }


# ------------------------------- layout plumbing (wrapper) -------------------------------
def _merge_dirs(gx_bt, Hdp, T_pad):
    # (B, T, 8*Hdp) batch-major -> (T_pad, B, 8*Hdp) time-major with the
    # backward-direction gate groups time-reversed; zero-pad trailing steps.
    B, T, G = gx_bt.shape
    gx_tm = jnp.transpose(gx_bt, (1, 0, 2)).reshape(T, B, 8, Hdp)
    fwd = (jnp.arange(8) % 2) == 0                       # groups 0,2,4,6 = forward
    gx_m = jnp.where(fwd[None, None, :, None], gx_tm, gx_tm[::-1])
    gx_m = gx_m.reshape(T, B, 8 * Hdp)
    if T_pad > T:
        gx_m = jnp.pad(gx_m, ((0, T_pad - T), (0, 0), (0, 0)))
    return gx_m


def _unmerge_dirs(out_tm, T, Hd, Hdp):
    # (T_pad, B, 2*Hdp) recurrence-step major -> (B, T, 2*Hd)
    o = out_tm[:T]
    fwd = o[:, :, :Hd]
    bwd = o[::-1, :, Hdp:Hdp + Hd]
    return jnp.transpose(jnp.concatenate([fwd, bwd], axis=-1), (1, 0, 2))


# --------------------------------- Encoder forward ----------------------------------
def encoder_forward(context, query, params):
    B, Tc, D = context.shape
    _, Tq, _ = query.shape
    hidden = params["ws"].shape[1]
    assert hidden % 2 == 0
    Hd = hidden // 2
    Hdp = _round_up(Hd, 16)           # 8*Hdp is a multiple of 128 lanes
    pk = _pack_params(params, Hd, Hdp)

    # One fused row-slab pass over context + query (shared sampler/highway/W_ih).
    x_rows = jnp.concatenate(
        [context.reshape(B * Tc, D), query.reshape(B * Tq, D)],
        axis=0).astype(jnp.bfloat16)
    gx = frontend(x_rows, pk)                       # (B*(Tc+Tq), 8*Hdp) f32

    gx_c = gx[:B * Tc].reshape(B, Tc, 8 * Hdp)
    gx_q = gx[B * Tc:].reshape(B, Tq, 8 * Hdp)

    # time-chunk size: O(chunk) VMEM; keep >=2 chunks when possible so the
    # cross-chunk state carry path is exercised even at toy sizes.
    T_max = max(Tc, Tq)
    tchunk = min(64, _round_up(T_max, 8))
    if _round_up(T_max, tchunk) // tchunk < 2 and T_max >= 16:
        tchunk = _round_up((T_max + 1) // 2, 8)
    T_pad = _round_up(T_max, tchunk)

    gx_cm = _merge_dirs(gx_c, Hdp, T_pad)
    gx_qm = _merge_dirs(gx_q, Hdp, T_pad)
    gx_all = jnp.stack([gx_cm, gx_qm], axis=0)      # (2, T_pad, B, 8*Hdp)

    out = bilstm(gx_all, pk["whh_bd"], tchunk)      # (2, T_pad, B, 2*Hdp)

    H = _unmerge_dirs(out[0], Tc, Hd, Hdp)          # (B, Tc, hidden)
    U = _unmerge_dirs(out[1], Tq, Hd, Hdp)          # (B, Tq, hidden)
    # TODO(synk): nn.Dropout(opt.dropout) after the RNN is identity in eval mode.
    return H, U


# --------------------------------- parameter setup ----------------------------------
def init_params(key, word_vec=32, hidden=32):
    Hd = hidden // 2  # per-direction hidden (bidirectional)
    ks = jax.random.split(key, 16)
    n = lambda k, shape, s=0.1: (s * jax.random.normal(k, shape)).astype(jnp.float32)
    return {
        # sampler Linear(word_vec -> hidden)
        "ws": n(ks[0], (word_vec, hidden)), "bs": n(ks[1], (1, hidden)),
        # highway layer 1 (transform + gate)
        "wt1": n(ks[2], (hidden, hidden)), "bt1": n(ks[3], (1, hidden)),
        "wg1": n(ks[4], (hidden, hidden)), "bg1": n(ks[5], (1, hidden)),
        # highway layer 2
        "wt2": n(ks[6], (hidden, hidden)), "bt2": n(ks[7], (1, hidden)),
        "wg2": n(ks[8], (hidden, hidden)), "bg2": n(ks[9], (1, hidden)),
        # bidirectional LSTM (gate order i,f,g,o; bias = b_ih + b_hh combined)
        "wih_f": n(ks[10], (hidden, 4 * Hd)), "whh_f": n(ks[11], (Hd, 4 * Hd)),
        "b_f": n(ks[12], (1, 4 * Hd)),
        "wih_b": n(ks[13], (hidden, 4 * Hd)), "whh_b": n(ks[14], (Hd, 4 * Hd)),
        "b_b": n(ks[15], (1, 4 * Hd)),
    }


# ------------------------------ pure-JAX f32 reference ------------------------------
def _reference(context, query, params):
    def frontend_ref(x):
        h = x @ params["ws"] + params["bs"]
        for wt, bt, wg, bg in ((params["wt1"], params["bt1"], params["wg1"], params["bg1"]),
                               (params["wt2"], params["bt2"], params["wg2"], params["bg2"])):
            t = jax.nn.relu(h @ wt + bt)
            g = jax.nn.sigmoid(h @ wg + bg)
            h = g * t + (1.0 - g) * h
        return h

    def lstm_dir(xs, wih, whh, b, reverse):
        Hd = whh.shape[0]
        B, T, _ = xs.shape
        h = jnp.zeros((B, Hd), jnp.float32)
        c = jnp.zeros((B, Hd), jnp.float32)
        order = range(T - 1, -1, -1) if reverse else range(T)
        outs = [None] * T
        for t in order:
            gates = xs[:, t] @ wih + b + h @ whh
            i = jax.nn.sigmoid(gates[:, :Hd])
            f = jax.nn.sigmoid(gates[:, Hd:2 * Hd])
            g = jnp.tanh(gates[:, 2 * Hd:3 * Hd])
            o = jax.nn.sigmoid(gates[:, 3 * Hd:4 * Hd])
            c = f * c + i * g
            h = o * jnp.tanh(c)
            outs[t] = h
        return jnp.stack(outs, axis=1)

    def enc(x):
        B, T, D = x.shape
        h = frontend_ref(x.reshape(B * T, D)).reshape(B, T, -1)
        fwd = lstm_dir(h, params["wih_f"], params["whh_f"], params["b_f"], False)
        bwd = lstm_dir(h, params["wih_b"], params["whh_b"], params["b_b"], True)
        return jnp.concatenate([fwd, bwd], axis=-1)

    return enc(context), enc(query)


if __name__ == "__main__":
    # small shapes: batch=2, context_l=16, query_l=8, word_vec=32, hidden=32
    B, Tc, Tq, D, Hs = 2, 16, 8, 32, 32
    key = jax.random.PRNGKey(0)
    k1, k2, k3 = jax.random.split(key, 3)

    context = jax.random.normal(k1, (B, Tc, D), dtype=jnp.float32)
    query = jax.random.normal(k2, (B, Tq, D), dtype=jnp.float32)
    params = init_params(k3, word_vec=D, hidden=Hs)

    H, U = jax.jit(encoder_forward)(context, query, params)
    jax.block_until_ready((H, U))

    assert H.shape == (B, Tc, Hs), H.shape
    assert U.shape == (B, Tq, Hs), U.shape
    assert H.dtype == jnp.float32 and U.dtype == jnp.float32
    assert bool(jnp.all(jnp.isfinite(H))) and bool(jnp.all(jnp.isfinite(U)))

    # correctness vs f32 reference (bf16 matmul operands -> loose tolerance)
    Href, Uref = _reference(context, query, params)
    assert bool(jnp.max(jnp.abs(H - Href)) < 3e-2), float(jnp.max(jnp.abs(H - Href)))
    assert bool(jnp.max(jnp.abs(U - Uref)) < 3e-2), float(jnp.max(jnp.abs(U - Uref)))

    print("KERNEL_OK")
</pallas_src>

<mosaic_0001>
module attributes {stable_mosaic.version = 11 : i64} {
  func.func @frontend_kernel(%arg0: i32, %arg1: memref<32x32xbf16, #tpu.memory_space<vmem>>, %arg2: memref<32x32xbf16, #tpu.memory_space<vmem>>, %arg3: memref<1x32xf32, #tpu.memory_space<vmem>>, %arg4: memref<32x64xbf16, #tpu.memory_space<vmem>>, %arg5: memref<1x64xf32, #tpu.memory_space<vmem>>, %arg6: memref<32x64xbf16, #tpu.memory_space<vmem>>, %arg7: memref<1x64xf32, #tpu.memory_space<vmem>>, %arg8: memref<32x128xbf16, #tpu.memory_space<vmem>>, %arg9: memref<1x128xf32, #tpu.memory_space<vmem>>, %arg10: memref<32x128xf32, #tpu.memory_space<vmem>>) attributes {dimension_semantics = [#tpu.dimension_semantics<parallel>], iteration_bounds = array<i64: 2>, scalar_prefetch = 0 : i64, scratch_operands = 0 : i64, tpu.core_type = #tpu.core_type<tc>, window_params = [{transform_indices = @transform_0, window_bounds = array<i64: 32, 32>}, {pipeline_mode = #tpu.pipeline_mode<synchronous>, transform_indices = @transform_1, window_bounds = array<i64: 32, 32>}, {pipeline_mode = #tpu.pipeline_mode<synchronous>, transform_indices = @transform_2, window_bounds = array<i64: 1, 32>}, {pipeline_mode = #tpu.pipeline_mode<synchronous>, transform_indices = @transform_3, window_bounds = array<i64: 32, 64>}, {pipeline_mode = #tpu.pipeline_mode<synchronous>, transform_indices = @transform_4, window_bounds = array<i64: 1, 64>}, {pipeline_mode = #tpu.pipeline_mode<synchronous>, transform_indices = @transform_5, window_bounds = array<i64: 32, 64>}, {pipeline_mode = #tpu.pipeline_mode<synchronous>, transform_indices = @transform_6, window_bounds = array<i64: 1, 64>}, {pipeline_mode = #tpu.pipeline_mode<synchronous>, transform_indices = @transform_7, window_bounds = array<i64: 32, 128>}, {pipeline_mode = #tpu.pipeline_mode<synchronous>, transform_indices = @transform_8, window_bounds = array<i64: 1, 128>}, {transform_indices = @transform_9, window_bounds = array<i64: 32, 128>}]} {
    %c0 = arith.constant 0 : index
    %c0_0 = arith.constant 0 : index
    %0 = vector.load %arg1[%c0, %c0_0] : memref<32x32xbf16, #tpu.memory_space<vmem>>, vector<32x32xbf16>
    %c0_1 = arith.constant 0 : index
    %c0_2 = arith.constant 0 : index
    %1 = vector.load %arg2[%c0_1, %c0_2] : memref<32x32xbf16, #tpu.memory_space<vmem>>, vector<32x32xbf16>
    %cst = arith.constant dense<0.000000e+00> : vector<32x32xf32>
    %2 = tpu.matmul %0, %1, %cst {dimension_numbers = #tpu.dot_dimension_numbers<[1], [0], [0], [1], [0, 0, 1, 1], [], []>} : vector<32x32xbf16>, vector<32x32xbf16>, vector<32x32xf32> -> vector<32x32xf32>
    %c0_3 = arith.constant 0 : index
    %c0_4 = arith.constant 0 : index
    %3 = vector.load %arg3[%c0_3, %c0_4] : memref<1x32xf32, #tpu.memory_space<vmem>>, vector<1x32xf32>
    %4 = vector.broadcast %3 : vector<1x32xf32> to vector<32x32xf32>
    %5 = arith.addf %2, %4 : vector<32x32xf32>
    %6 = arith.truncf %5 : vector<32x32xf32> to vector<32x32xbf16>
    %c0_5 = arith.constant 0 : index
    %c0_6 = arith.constant 0 : index
    %7 = vector.load %arg4[%c0_5, %c0_6] : memref<32x64xbf16, #tpu.memory_space<vmem>>, vector<32x64xbf16>
    %cst_7 = arith.constant dense<0.000000e+00> : vector<32x64xf32>
    %8 = tpu.matmul %6, %7, %cst_7 {dimension_numbers = #tpu.dot_dimension_numbers<[1], [0], [0], [1], [0, 0, 1, 1], [], []>} : vector<32x32xbf16>, vector<32x64xbf16>, vector<32x64xf32> -> vector<32x64xf32>
    %c0_8 = arith.constant 0 : index
    %c0_9 = arith.constant 0 : index
    %9 = vector.load %arg5[%c0_8, %c0_9] : memref<1x64xf32, #tpu.memory_space<vmem>>, vector<1x64xf32>
    %10 = vector.broadcast %9 : vector<1x64xf32> to vector<32x64xf32>
    %11 = arith.addf %8, %10 : vector<32x64xf32>
    %12 = vector.extract_strided_slice %11 {offsets = [0, 0], sizes = [32, 32], strides = [1, 1]} : vector<32x64xf32> to vector<32x32xf32>
    %cst_10 = arith.constant 0.000000e+00 : f32
    %13 = vector.broadcast %cst_10 : f32 to vector<32x32xf32>
    %14 = arith.maximumf %12, %13 : vector<32x32xf32>
    %15 = vector.extract_strided_slice %11 {offsets = [0, 32], sizes = [32, 32], strides = [1, 1]} : vector<32x64xf32> to vector<32x32xf32>
    %16 = arith.negf %15 : vector<32x32xf32>
    %17 = math.exp %16 : vector<32x32xf32>
    %cst_11 = arith.constant 1.000000e+00 : f32
    %18 = vector.broadcast %cst_11 : f32 to vector<32x32xf32>
    %19 = arith.addf %18, %17 : vector<32x32xf32>
    %20 = arith.divf %18, %19 : vector<32x32xf32>
    %21 = arith.mulf %20, %14 : vector<32x32xf32>
    %cst_12 = arith.constant 1.000000e+00 : f32
    %22 = vector.broadcast %cst_12 : f32 to vector<32x32xf32>
    %23 = arith.subf %22, %20 : vector<32x32xf32>
    %24 = arith.mulf %23, %5 : vector<32x32xf32>
    %25 = arith.addf %21, %24 : vector<32x32xf32>
    %26 = arith.truncf %25 : vector<32x32xf32> to vector<32x32xbf16>
    %c0_13 = arith.constant 0 : index
    %c0_14 = arith.constant 0 : index
    %27 = vector.load %arg6[%c0_13, %c0_14] : memref<32x64xbf16, #tpu.memory_space<vmem>>, vector<32x64xbf16>
    %cst_15 = arith.constant dense<0.000000e+00> : vector<32x64xf32>
    %28 = tpu.matmul %26, %27, %cst_15 {dimension_numbers = #tpu.dot_dimension_numbers<[1], [0], [0], [1], [0, 0, 1, 1], [], []>} : vector<32x32xbf16>, vector<32x64xbf16>, vector<32x64xf32> -> vector<32x64xf32>
    %c0_16 = arith.constant 0 : index
    %c0_17 = arith.constant 0 : index
    %29 = vector.load %arg7[%c0_16, %c0_17] : memref<1x64xf32, #tpu.memory_space<vmem>>, vector<1x64xf32>
    %30 = vector.broadcast %29 : vector<1x64xf32> to vector<32x64xf32>
    %31 = arith.addf %28, %30 : vector<32x64xf32>
    %32 = vector.extract_strided_slice %31 {offsets = [0, 0], sizes = [32, 32], strides = [1, 1]} : vector<32x64xf32> to vector<32x32xf32>
    %cst_18 = arith.constant 0.000000e+00 : f32
    %33 = vector.broadcast %cst_18 : f32 to vector<32x32xf32>
    %34 = arith.maximumf %32, %33 : vector<32x32xf32>
    %35 = vector.extract_strided_slice %31 {offsets = [0, 32], sizes = [32, 32], strides = [1, 1]} : vector<32x64xf32> to vector<32x32xf32>
    %36 = arith.negf %35 : vector<32x32xf32>
    %37 = math.exp %36 : vector<32x32xf32>
    %cst_19 = arith.constant 1.000000e+00 : f32
    %38 = vector.broadcast %cst_19 : f32 to vector<32x32xf32>
    %39 = arith.addf %38, %37 : vector<32x32xf32>
    %40 = arith.divf %38, %39 : vector<32x32xf32>
    %41 = arith.mulf %40, %34 : vector<32x32xf32>
    %cst_20 = arith.constant 1.000000e+00 : f32
    %42 = vector.broadcast %cst_20 : f32 to vector<32x32xf32>
    %43 = arith.subf %42, %40 : vector<32x32xf32>
    %44 = arith.mulf %43, %25 : vector<32x32xf32>
    %45 = arith.addf %41, %44 : vector<32x32xf32>
    %46 = arith.truncf %45 : vector<32x32xf32> to vector<32x32xbf16>
    %c0_21 = arith.constant 0 : index
    %c0_22 = arith.constant 0 : index
    %47 = vector.load %arg8[%c0_21, %c0_22] : memref<32x128xbf16, #tpu.memory_space<vmem>>, vector<32x128xbf16>
    %cst_23 = arith.constant dense<0.000000e+00> : vector<32x128xf32>
    %48 = tpu.matmul %46, %47, %cst_23 {dimension_numbers = #tpu.dot_dimension_numbers<[1], [0], [0], [1], [0, 0, 1, 1], [], []>} : vector<32x32xbf16>, vector<32x128xbf16>, vector<32x128xf32> -> vector<32x128xf32>
    %c0_24 = arith.constant 0 : index
    %c0_25 = arith.constant 0 : index
    %49 = vector.load %arg9[%c0_24, %c0_25] : memref<1x128xf32, #tpu.memory_space<vmem>>, vector<1x128xf32>
    %50 = vector.broadcast %49 : vector<1x128xf32> to vector<32x128xf32>
    %51 = arith.addf %48, %50 : vector<32x128xf32>
    %c0_26 = arith.constant 0 : index
    %c0_27 = arith.constant 0 : index
    %52 = vector.load %arg10[%c0_26, %c0_27] : memref<32x128xf32, #tpu.memory_space<vmem>>, vector<32x128xf32>
    tpu.vector_store %arg10[%c0_26, %c0_27], %51 {strides = array<i32>} : memref<32x128xf32, #tpu.memory_space<vmem>>, vector<32x128xf32>,
    return
  }
  func.func @transform_0(%arg0: i32) -> (i32, i32) {
    %c0_i32 = arith.constant 0 : i32
    %c0_i32_0 = arith.constant 0 : i32
    return %arg0, %c0_i32 : i32, i32
  }
  func.func @transform_1(%arg0: i32) -> (i32, i32) {
    %c0_i32 = arith.constant 0 : i32
    %c0_i32_0 = arith.constant 0 : i32
    %c0_i32_1 = arith.constant 0 : i32
    return %c0_i32, %c0_i32_0 : i32, i32
  }
  func.func @transform_2(%arg0: i32) -> (i32, i32) {
    %c0_i32 = arith.constant 0 : i32
    %c0_i32_0 = arith.constant 0 : i32
    %c0_i32_1 = arith.constant 0 : i32
    return %c0_i32, %c0_i32_0 : i32, i32
  }
  func.func @transform_3(%arg0: i32) -> (i32, i32) {
    %c0_i32 = arith.constant 0 : i32
    %c0_i32_0 = arith.constant 0 : i32
    %c0_i32_1 = arith.constant 0 : i32
    return %c0_i32, %c0_i32_0 : i32, i32
  }
  func.func @transform_4(%arg0: i32) -> (i32, i32) {
    %c0_i32 = arith.constant 0 : i32
    %c0_i32_0 = arith.constant 0 : i32
    %c0_i32_1 = arith.constant 0 : i32
    return %c0_i32, %c0_i32_0 : i32, i32
  }
  func.func @transform_5(%arg0: i32) -> (i32, i32) {
    %c0_i32 = arith.constant 0 : i32
    %c0_i32_0 = arith.constant 0 : i32
    %c0_i32_1 = arith.constant 0 : i32
    return %c0_i32, %c0_i32_0 : i32, i32
  }
  func.func @transform_6(%arg0: i32) -> (i32, i32) {
    %c0_i32 = arith.constant 0 : i32
    %c0_i32_0 = arith.constant 0 : i32
    %c0_i32_1 = arith.constant 0 : i32
    return %c0_i32, %c0_i32_0 : i32, i32
  }
  func.func @transform_7(%arg0: i32) -> (i32, i32) {
    %c0_i32 = arith.constant 0 : i32
    %c0_i32_0 = arith.constant 0 : i32
    %c0_i32_1 = arith.constant 0 : i32
    return %c0_i32, %c0_i32_0 : i32, i32
  }
  func.func @transform_8(%arg0: i32) -> (i32, i32) {
    %c0_i32 = arith.constant 0 : i32
    %c0_i32_0 = arith.constant 0 : i32
    %c0_i32_1 = arith.constant 0 : i32
    return %c0_i32, %c0_i32_0 : i32, i32
  }
  func.func @transform_9(%arg0: i32) -> (i32, i32) {
    %c0_i32 = arith.constant 0 : i32
    %c0_i32_0 = arith.constant 0 : i32
    return %arg0, %c0_i32 : i32, i32
  }
}

module attributes {stable_mosaic.version = 11 : i64} {
  func.func @bilstm_kernel(%arg0: i32, %arg1: i32, %arg2: memref<1x8x2x128xf32, #tpu.memory_space<vmem>>, %arg3: memref<32x128xbf16, #tpu.memory_space<vmem>>, %arg4: memref<1x8x2x32xf32, #tpu.memory_space<vmem>>, %arg5: memref<2x32xf32, #tpu.memory_space<vmem>>, %arg6: memref<2x32xf32, #tpu.memory_space<vmem>>) attributes {dimension_semantics = [#tpu.dimension_semantics<parallel>, #tpu.dimension_semantics<arbitrary>], iteration_bounds = array<i64: 2, 2>, scalar_prefetch = 0 : i64, scratch_operands = 2 : i64, tpu.core_type = #tpu.core_type<tc>, window_params = [{transform_indices = @transform_0, window_bounds = array<i64: 1, 8, 2, 128>}, {pipeline_mode = #tpu.pipeline_mode<synchronous>, transform_indices = @transform_1, window_bounds = array<i64: 32, 128>}, {transform_indices = @transform_2, window_bounds = array<i64: 1, 8, 2, 32>}]} {
    %c0_i32 = arith.constant 0 : i32
    %0 = arith.cmpi eq, %arg1, %c0_i32 : i32
    %1 = arith.extui %0 : i1 to i32
    %c0_i32_0 = arith.constant 0 : i32
    %2 = arith.cmpi ne, %1, %c0_i32_0 : i32
    scf.if %2 {
      %cst_74 = arith.constant 0.000000e+00 : f32
      %216 = vector.broadcast %cst_74 : f32 to vector<2x32xf32>
      %c0_75 = arith.constant 0 : index
      %c0_76 = arith.constant 0 : index
      %217 = vector.load %arg5[%c0_75, %c0_76] : memref<2x32xf32, #tpu.memory_space<vmem>>, vector<2x32xf32>
      tpu.vector_store %arg5[%c0_75, %c0_76], %216 {strides = array<i32>} : memref<2x32xf32, #tpu.memory_space<vmem>>, vector<2x32xf32>,
      %cst_77 = arith.constant 0.000000e+00 : f32
      %218 = vector.broadcast %cst_77 : f32 to vector<2x32xf32>
      %c0_78 = arith.constant 0 : index
      %c0_79 = arith.constant 0 : index
      %219 = vector.load %arg6[%c0_78, %c0_79] : memref<2x32xf32, #tpu.memory_space<vmem>>, vector<2x32xf32>
      tpu.vector_store %arg6[%c0_78, %c0_79], %218 {strides = array<i32>} : memref<2x32xf32, #tpu.memory_space<vmem>>, vector<2x32xf32>,
    } else {
    }
    %c0 = arith.constant 0 : index
    %c0_1 = arith.constant 0 : index
    %3 = vector.load %arg3[%c0, %c0_1] : memref<32x128xbf16, #tpu.memory_space<vmem>>, vector<32x128xbf16>
    %c0_2 = arith.constant 0 : index
    %c0_3 = arith.constant 0 : index
    %4 = vector.load %arg5[%c0_2, %c0_3] : memref<2x32xf32, #tpu.memory_space<vmem>>, vector<2x32xf32>
    %c0_4 = arith.constant 0 : index
    %c0_5 = arith.constant 0 : index
    %5 = vector.load %arg6[%c0_4, %c0_5] : memref<2x32xf32, #tpu.memory_space<vmem>>, vector<2x32xf32>
    %c0_i32_6 = arith.constant 0 : i32
    %c0_7 = arith.constant 0 : index
    %6 = arith.index_cast %c0_i32_6 : i32 to index
    %c0_8 = arith.constant 0 : index
    %c0_9 = arith.constant 0 : index
    %7 = vector.load %arg2[%c0_7, %6, %c0_8, %c0_9] : memref<1x8x2x128xf32, #tpu.memory_space<vmem>>, vector<1x1x2x128xf32>
    %8 = vector.shape_cast %7 : vector<1x1x2x128xf32> to vector<2x128xf32>
    %9 = arith.truncf %4 : vector<2x32xf32> to vector<2x32xbf16>
    %cst = arith.constant dense<0.000000e+00> : vector<2x128xf32>
    %10 = tpu.matmul %9, %3, %cst {dimension_numbers = #tpu.dot_dimension_numbers<[1], [0], [0], [1], [0, 0, 1, 1], [], []>} : vector<2x32xbf16>, vector<32x128xbf16>, vector<2x128xf32> -> vector<2x128xf32>
    %11 = arith.addf %8, %10 : vector<2x128xf32>
    %12 = vector.extract_strided_slice %11 {offsets = [0, 0], sizes = [2, 96], strides = [1, 1]} : vector<2x128xf32> to vector<2x96xf32>
    %13 = arith.negf %12 : vector<2x96xf32>
    %14 = math.exp %13 : vector<2x96xf32>
    %cst_10 = arith.constant 1.000000e+00 : f32
    %15 = vector.broadcast %cst_10 : f32 to vector<2x96xf32>
    %16 = arith.addf %15, %14 : vector<2x96xf32>
    %17 = arith.divf %15, %16 : vector<2x96xf32>
    %18 = vector.extract_strided_slice %11 {offsets = [0, 96], sizes = [2, 32], strides = [1, 1]} : vector<2x128xf32> to vector<2x32xf32>
    %19 = math.tanh %18 : vector<2x32xf32>
    %20 = vector.extract_strided_slice %17 {offsets = [0, 0], sizes = [2, 32], strides = [1, 1]} : vector<2x96xf32> to vector<2x32xf32>
    %21 = vector.extract_strided_slice %17 {offsets = [0, 32], sizes = [2, 32], strides = [1, 1]} : vector<2x96xf32> to vector<2x32xf32>
    %22 = vector.extract_strided_slice %17 {offsets = [0, 64], sizes = [2, 32], strides = [1, 1]} : vector<2x96xf32> to vector<2x32xf32>
    %23 = arith.mulf %21, %5 : vector<2x32xf32>
    %24 = arith.mulf %20, %19 : vector<2x32xf32>
    %25 = arith.addf %23, %24 : vector<2x32xf32>
    %26 = math.tanh %25 : vector<2x32xf32>
    %27 = arith.mulf %22, %26 : vector<2x32xf32>
    %c0_11 = arith.constant 0 : index
    %28 = arith.index_cast %c0_i32_6 : i32 to index
    %c0_12 = arith.constant 0 : index
    %c0_13 = arith.constant 0 : index
    %29 = vector.load %arg4[%c0_11, %28, %c0_12, %c0_13] : memref<1x8x2x32xf32, #tpu.memory_space<vmem>>, vector<1x1x2x32xf32>
    %30 = vector.shape_cast %29 : vector<1x1x2x32xf32> to vector<2x32xf32>
    %31 = vector.shape_cast %27 : vector<2x32xf32> to vector<1x1x2x32xf32>
    tpu.vector_store %arg4[%c0_11, %28, %c0_12, %c0_13], %31 {strides = array<i32>} : memref<1x8x2x32xf32, #tpu.memory_space<vmem>>, vector<1x1x2x32xf32>,
    %c1_i32 = arith.constant 1 : i32
    %c0_14 = arith.constant 0 : index
    %32 = arith.index_cast %c1_i32 : i32 to index
    %c0_15 = arith.constant 0 : index
    %c0_16 = arith.constant 0 : index
    %33 = vector.load %arg2[%c0_14, %32, %c0_15, %c0_16] : memref<1x8x2x128xf32, #tpu.memory_space<vmem>>, vector<1x1x2x128xf32>
    %34 = vector.shape_cast %33 : vector<1x1x2x128xf32> to vector<2x128xf32>
    %35 = arith.truncf %27 : vector<2x32xf32> to vector<2x32xbf16>
    %cst_17 = arith.constant dense<0.000000e+00> : vector<2x128xf32>
    %36 = tpu.matmul %35, %3, %cst_17 {dimension_numbers = #tpu.dot_dimension_numbers<[1], [0], [0], [1], [0, 0, 1, 1], [], []>} : vector<2x32xbf16>, vector<32x128xbf16>, vector<2x128xf32> -> vector<2x128xf32>
    %37 = arith.addf %34, %36 : vector<2x128xf32>
    %38 = vector.extract_strided_slice %37 {offsets = [0, 0], sizes = [2, 96], strides = [1, 1]} : vector<2x128xf32> to vector<2x96xf32>
    %39 = arith.negf %38 : vector<2x96xf32>
    %40 = math.exp %39 : vector<2x96xf32>
    %cst_18 = arith.constant 1.000000e+00 : f32
    %41 = vector.broadcast %cst_18 : f32 to vector<2x96xf32>
    %42 = arith.addf %41, %40 : vector<2x96xf32>
    %43 = arith.divf %41, %42 : vector<2x96xf32>
    %44 = vector.extract_strided_slice %37 {offsets = [0, 96], sizes = [2, 32], strides = [1, 1]} : vector<2x128xf32> to vector<2x32xf32>
    %45 = math.tanh %44 : vector<2x32xf32>
    %46 = vector.extract_strided_slice %43 {offsets = [0, 0], sizes = [2, 32], strides = [1, 1]} : vector<2x96xf32> to vector<2x32xf32>
    %47 = vector.extract_strided_slice %43 {offsets = [0, 32], sizes = [2, 32], strides = [1, 1]} : vector<2x96xf32> to vector<2x32xf32>
    %48 = vector.extract_strided_slice %43 {offsets = [0, 64], sizes = [2, 32], strides = [1, 1]} : vector<2x96xf32> to vector<2x32xf32>
    %49 = arith.mulf %47, %25 : vector<2x32xf32>
    %50 = arith.mulf %46, %45 : vector<2x32xf32>
    %51 = arith.addf %49, %50 : vector<2x32xf32>
    %52 = math.tanh %51 : vector<2x32xf32>
    %53 = arith.mulf %48, %52 : vector<2x32xf32>
    %c0_19 = arith.constant 0 : index
    %54 = arith.index_cast %c1_i32 : i32 to index
    %c0_20 = arith.constant 0 : index
    %c0_21 = arith.constant 0 : index
    %55 = vector.load %arg4[%c0_19, %54, %c0_20, %c0_21] : memref<1x8x2x32xf32, #tpu.memory_space<vmem>>, vector<1x1x2x32xf32>
    %56 = vector.shape_cast %55 : vector<1x1x2x32xf32> to vector<2x32xf32>
    %57 = vector.shape_cast %53 : vector<2x32xf32> to vector<1x1x2x32xf32>
    tpu.vector_store %arg4[%c0_19, %54, %c0_20, %c0_21], %57 {strides = array<i32>} : memref<1x8x2x32xf32, #tpu.memory_space<vmem>>, vector<1x1x2x32xf32>,
    %c2_i32 = arith.constant 2 : i32
    %c0_22 = arith.constant 0 : index
    %58 = arith.index_cast %c2_i32 : i32 to index
    %c0_23 = arith.constant 0 : index
    %c0_24 = arith.constant 0 : index
    %59 = vector.load %arg2[%c0_22, %58, %c0_23, %c0_24] : memref<1x8x2x128xf32, #tpu.memory_space<vmem>>, vector<1x1x2x128xf32>
    %60 = vector.shape_cast %59 : vector<1x1x2x128xf32> to vector<2x128xf32>
    %61 = arith.truncf %53 : vector<2x32xf32> to vector<2x32xbf16>
    %cst_25 = arith.constant dense<0.000000e+00> : vector<2x128xf32>
    %62 = tpu.matmul %61, %3, %cst_25 {dimension_numbers = #tpu.dot_dimension_numbers<[1], [0], [0], [1], [0, 0, 1, 1], [], []>} : vector<2x32xbf16>, vector<32x128xbf16>, vector<2x128xf32> -> vector<2x128xf32>
    %63 = arith.addf %60, %62 : vector<2x128xf32>
    %64 = vector.extract_strided_slice %63 {offsets = [0, 0], sizes = [2, 96], strides = [1, 1]} : vector<2x128xf32> to vector<2x96xf32>
    %65 = arith.negf %64 : vector<2x96xf32>
    %66 = math.exp %65 : vector<2x96xf32>
    %cst_26 = arith.constant 1.000000e+00 : f32
    %67 = vector.broadcast %cst_26 : f32 to vector<2x96xf32>
    %68 = arith.addf %67, %66 : vector<2x96xf32>
    %69 = arith.divf %67, %68 : vector<2x96xf32>
    %70 = vector.extract_strided_slice %63 {offsets = [0, 96], sizes = [2, 32], strides = [1, 1]} : vector<2x128xf32> to vector<2x32xf32>
    %71 = math.tanh %70 : vector<2x32xf32>
    %72 = vector.extract_strided_slice %69 {offsets = [0, 0], sizes = [2, 32], strides = [1, 1]} : vector<2x96xf32> to vector<2x32xf32>
    %73 = vector.extract_strided_slice %69 {offsets = [0, 32], sizes = [2, 32], strides = [1, 1]} : vector<2x96xf32> to vector<2x32xf32>
    %74 = vector.extract_strided_slice %69 {offsets = [0, 64], sizes = [2, 32], strides = [1, 1]} : vector<2x96xf32> to vector<2x32xf32>
    %75 = arith.mulf %73, %51 : vector<2x32xf32>
    %76 = arith.mulf %72, %71 : vector<2x32xf32>
    %77 = arith.addf %75, %76 : vector<2x32xf32>
    %78 = math.tanh %77 : vector<2x32xf32>
    %79 = arith.mulf %74, %78 : vector<2x32xf32>
    %c0_27 = arith.constant 0 : index
    %80 = arith.index_cast %c2_i32 : i32 to index
    %c0_28 = arith.constant 0 : index
    %c0_29 = arith.constant 0 : index
    %81 = vector.load %arg4[%c0_27, %80, %c0_28, %c0_29] : memref<1x8x2x32xf32, #tpu.memory_space<vmem>>, vector<1x1x2x32xf32>
    %82 = vector.shape_cast %81 : vector<1x1x2x32xf32> to vector<2x32xf32>
    %83 = vector.shape_cast %79 : vector<2x32xf32> to vector<1x1x2x32xf32>
    tpu.vector_store %arg4[%c0_27, %80, %c0_28, %c0_29], %83 {strides = array<i32>} : memref<1x8x2x32xf32, #tpu.memory_space<vmem>>, vector<1x1x2x32xf32>,
    %c3_i32 = arith.constant 3 : i32
    %c0_30 = arith.constant 0 : index
    %84 = arith.index_cast %c3_i32 : i32 to index
    %c0_31 = arith.constant 0 : index
    %c0_32 = arith.constant 0 : index
    %85 = vector.load %arg2[%c0_30, %84, %c0_31, %c0_32] : memref<1x8x2x128xf32, #tpu.memory_space<vmem>>, vector<1x1x2x128xf32>
    %86 = vector.shape_cast %85 : vector<1x1x2x128xf32> to vector<2x128xf32>
    %87 = arith.truncf %79 : vector<2x32xf32> to vector<2x32xbf16>
    %cst_33 = arith.constant dense<0.000000e+00> : vector<2x128xf32>
    %88 = tpu.matmul %87, %3, %cst_33 {dimension_numbers = #tpu.dot_dimension_numbers<[1], [0], [0], [1], [0, 0, 1, 1], [], []>} : vector<2x32xbf16>, vector<32x128xbf16>, vector<2x128xf32> -> vector<2x128xf32>
    %89 = arith.addf %86, %88 : vector<2x128xf32>
    %90 = vector.extract_strided_slice %89 {offsets = [0, 0], sizes = [2, 96], strides = [1, 1]} : vector<2x128xf32> to vector<2x96xf32>
    %91 = arith.negf %90 : vector<2x96xf32>
    %92 = math.exp %91 : vector<2x96xf32>
    %cst_34 = arith.constant 1.000000e+00 : f32
    %93 = vector.broadcast %cst_34 : f32 to vector<2x96xf32>
    %94 = arith.addf %93, %92 : vector<2x96xf32>
    %95 = arith.divf %93, %94 : vector<2x96xf32>
    %96 = vector.extract_strided_slice %89 {offsets = [0, 96], sizes = [2, 32], strides = [1, 1]} : vector<2x128xf32> to vector<2x32xf32>
    %97 = math.tanh %96 : vector<2x32xf32>
    %98 = vector.extract_strided_slice %95 {offsets = [0, 0], sizes = [2, 32], strides = [1, 1]} : vector<2x96xf32> to vector<2x32xf32>
    %99 = vector.extract_strided_slice %95 {offsets = [0, 32], sizes = [2, 32], strides = [1, 1]} : vector<2x96xf32> to vector<2x32xf32>
    %100 = vector.extract_strided_slice %95 {offsets = [0, 64], sizes = [2, 32], strides = [1, 1]} : vector<2x96xf32> to vector<2x32xf32>
    %101 = arith.mulf %99, %77 : vector<2x32xf32>
    %102 = arith.mulf %98, %97 : vector<2x32xf32>
    %103 = arith.addf %101, %102 : vector<2x32xf32>
    %104 = math.tanh %103 : vector<2x32xf32>
    %105 = arith.mulf %100, %104 : vector<2x32xf32>
    %c0_35 = arith.constant 0 : index
    %106 = arith.index_cast %c3_i32 : i32 to index
    %c0_36 = arith.constant 0 : index
    %c0_37 = arith.constant 0 : index
    %107 = vector.load %arg4[%c0_35, %106, %c0_36, %c0_37] : memref<1x8x2x32xf32, #tpu.memory_space<vmem>>, vector<1x1x2x32xf32>
    %108 = vector.shape_cast %107 : vector<1x1x2x32xf32> to vector<2x32xf32>
    %109 = vector.shape_cast %105 : vector<2x32xf32> to vector<1x1x2x32xf32>
    tpu.vector_store %arg4[%c0_35, %106, %c0_36, %c0_37], %109 {strides = array<i32>} : memref<1x8x2x32xf32, #tpu.memory_space<vmem>>, vector<1x1x2x32xf32>,
    %c4_i32 = arith.constant 4 : i32
    %c0_38 = arith.constant 0 : index
    %110 = arith.index_cast %c4_i32 : i32 to index
    %c0_39 = arith.constant 0 : index
    %c0_40 = arith.constant 0 : index
    %111 = vector.load %arg2[%c0_38, %110, %c0_39, %c0_40] : memref<1x8x2x128xf32, #tpu.memory_space<vmem>>, vector<1x1x2x128xf32>
    %112 = vector.shape_cast %111 : vector<1x1x2x128xf32> to vector<2x128xf32>
    %113 = arith.truncf %105 : vector<2x32xf32> to vector<2x32xbf16>
    %cst_41 = arith.constant dense<0.000000e+00> : vector<2x128xf32>
    %114 = tpu.matmul %113, %3, %cst_41 {dimension_numbers = #tpu.dot_dimension_numbers<[1], [0], [0], [1], [0, 0, 1, 1], [], []>} : vector<2x32xbf16>, vector<32x128xbf16>, vector<2x128xf32> -> vector<2x128xf32>
    %115 = arith.addf %112, %114 : vector<2x128xf32>
    %116 = vector.extract_strided_slice %115 {offsets = [0, 0], sizes = [2, 96], strides = [1, 1]} : vector<2x128xf32> to vector<2x96xf32>
    %117 = arith.negf %116 : vector<2x96xf32>
    %118 = math.exp %117 : vector<2x96xf32>
    %cst_42 = arith.constant 1.000000e+00 : f32
    %119 = vector.broadcast %cst_42 : f32 to vector<2x96xf32>
    %120 = arith.addf %119, %118 : vector<2x96xf32>
    %121 = arith.divf %119, %120 : vector<2x96xf32>
    %122 = vector.extract_strided_slice %115 {offsets = [0, 96], sizes = [2, 32], strides = [1, 1]} : vector<2x128xf32> to vector<2x32xf32>
    %123 = math.tanh %122 : vector<2x32xf32>
    %124 = vector.extract_strided_slice %121 {offsets = [0, 0], sizes = [2, 32], strides = [1, 1]} : vector<2x96xf32> to vector<2x32xf32>
    %125 = vector.extract_strided_slice %121 {offsets = [0, 32], sizes = [2, 32], strides = [1, 1]} : vector<2x96xf32> to vector<2x32xf32>
    %126 = vector.extract_strided_slice %121 {offsets = [0, 64], sizes = [2, 32], strides = [1, 1]} : vector<2x96xf32> to vector<2x32xf32>
    %127 = arith.mulf %125, %103 : vector<2x32xf32>
    %128 = arith.mulf %124, %123 : vector<2x32xf32>
    %129 = arith.addf %127, %128 : vector<2x32xf32>
    %130 = math.tanh %129 : vector<2x32xf32>
    %131 = arith.mulf %126, %130 : vector<2x32xf32>
    %c0_43 = arith.constant 0 : index
    %132 = arith.index_cast %c4_i32 : i32 to index
    %c0_44 = arith.constant 0 : index
    %c0_45 = arith.constant 0 : index
    %133 = vector.load %arg4[%c0_43, %132, %c0_44, %c0_45] : memref<1x8x2x32xf32, #tpu.memory_space<vmem>>, vector<1x1x2x32xf32>
    %134 = vector.shape_cast %133 : vector<1x1x2x32xf32> to vector<2x32xf32>
    %135 = vector.shape_cast %131 : vector<2x32xf32> to vector<1x1x2x32xf32>
    tpu.vector_store %arg4[%c0_43, %132, %c0_44, %c0_45], %135 {strides = array<i32>} : memref<1x8x2x32xf32, #tpu.memory_space<vmem>>, vector<1x1x2x32xf32>,
    %c5_i32 = arith.constant 5 : i32
    %c0_46 = arith.constant 0 : index
    %136 = arith.index_cast %c5_i32 : i32 to index
    %c0_47 = arith.constant 0 : index
    %c0_48 = arith.constant 0 : index
    %137 = vector.load %arg2[%c0_46, %136, %c0_47, %c0_48] : memref<1x8x2x128xf32, #tpu.memory_space<vmem>>, vector<1x1x2x128xf32>
    %138 = vector.shape_cast %137 : vector<1x1x2x128xf32> to vector<2x128xf32>
    %139 = arith.truncf %131 : vector<2x32xf32> to vector<2x32xbf16>
    %cst_49 = arith.constant dense<0.000000e+00> : vector<2x128xf32>
    %140 = tpu.matmul %139, %3, %cst_49 {dimension_numbers = #tpu.dot_dimension_numbers<[1], [0], [0], [1], [0, 0, 1, 1], [], []>} : vector<2x32xbf16>, vector<32x128xbf16>, vector<2x128xf32> -> vector<2x128xf32>
    %141 = arith.addf %138, %140 : vector<2x128xf32>
    %142 = vector.extract_strided_slice %141 {offsets = [0, 0], sizes = [2, 96], strides = [1, 1]} : vector<2x128xf32> to vector<2x96xf32>
    %143 = arith.negf %142 : vector<2x96xf32>
    %144 = math.exp %143 : vector<2x96xf32>
    %cst_50 = arith.constant 1.000000e+00 : f32
    %145 = vector.broadcast %cst_50 : f32 to vector<2x96xf32>
    %146 = arith.addf %145, %144 : vector<2x96xf32>
    %147 = arith.divf %145, %146 : vector<2x96xf32>
    %148 = vector.extract_strided_slice %141 {offsets = [0, 96], sizes = [2, 32], strides = [1, 1]} : vector<2x128xf32> to vector<2x32xf32>
    %149 = math.tanh %148 : vector<2x32xf32>
    %150 = vector.extract_strided_slice %147 {offsets = [0, 0], sizes = [2, 32], strides = [1, 1]} : vector<2x96xf32> to vector<2x32xf32>
    %151 = vector.extract_strided_slice %147 {offsets = [0, 32], sizes = [2, 32], strides = [1, 1]} : vector<2x96xf32> to vector<2x32xf32>
    %152 = vector.extract_strided_slice %147 {offsets = [0, 64], sizes = [2, 32], strides = [1, 1]} : vector<2x96xf32> to vector<2x32xf32>
    %153 = arith.mulf %151, %129 : vector<2x32xf32>
    %154 = arith.mulf %150, %149 : vector<2x32xf32>
    %155 = arith.addf %153, %154 : vector<2x32xf32>
    %156 = math.tanh %155 : vector<2x32xf32>
    %157 = arith.mulf %152, %156 : vector<2x32xf32>
    %c0_51 = arith.constant 0 : index
    %158 = arith.index_cast %c5_i32 : i32 to index
    %c0_52 = arith.constant 0 : index
    %c0_53 = arith.constant 0 : index
    %159 = vector.load %arg4[%c0_51, %158, %c0_52, %c0_53] : memref<1x8x2x32xf32, #tpu.memory_space<vmem>>, vector<1x1x2x32xf32>
    %160 = vector.shape_cast %159 : vector<1x1x2x32xf32> to vector<2x32xf32>
    %161 = vector.shape_cast %157 : vector<2x32xf32> to vector<1x1x2x32xf32>
    tpu.vector_store %arg4[%c0_51, %158, %c0_52, %c0_53], %161 {strides = array<i32>} : memref<1x8x2x32xf32, #tpu.memory_space<vmem>>, vector<1x1x2x32xf32>,
    %c6_i32 = arith.constant 6 : i32
    %c0_54 = arith.constant 0 : index
    %162 = arith.index_cast %c6_i32 : i32 to index
    %c0_55 = arith.constant 0 : index
    %c0_56 = arith.constant 0 : index
    %163 = vector.load %arg2[%c0_54, %162, %c0_55, %c0_56] : memref<1x8x2x128xf32, #tpu.memory_space<vmem>>, vector<1x1x2x128xf32>
    %164 = vector.shape_cast %163 : vector<1x1x2x128xf32> to vector<2x128xf32>
    %165 = arith.truncf %157 : vector<2x32xf32> to vector<2x32xbf16>
    %cst_57 = arith.constant dense<0.000000e+00> : vector<2x128xf32>
    %166 = tpu.matmul %165, %3, %cst_57 {dimension_numbers = #tpu.dot_dimension_numbers<[1], [0], [0], [1], [0, 0, 1, 1], [], []>} : vector<2x32xbf16>, vector<32x128xbf16>, vector<2x128xf32> -> vector<2x128xf32>
    %167 = arith.addf %164, %166 : vector<2x128xf32>
    %168 = vector.extract_strided_slice %167 {offsets = [0, 0], sizes = [2, 96], strides = [1, 1]} : vector<2x128xf32> to vector<2x96xf32>
    %169 = arith.negf %168 : vector<2x96xf32>
    %170 = math.exp %169 : vector<2x96xf32>
    %cst_58 = arith.constant 1.000000e+00 : f32
    %171 = vector.broadcast %cst_58 : f32 to vector<2x96xf32>
    %172 = arith.addf %171, %170 : vector<2x96xf32>
    %173 = arith.divf %171, %172 : vector<2x96xf32>
    %174 = vector.extract_strided_slice %167 {offsets = [0, 96], sizes = [2, 32], strides = [1, 1]} : vector<2x128xf32> to vector<2x32xf32>
    %175 = math.tanh %174 : vector<2x32xf32>
    %176 = vector.extract_strided_slice %173 {offsets = [0, 0], sizes = [2, 32], strides = [1, 1]} : vector<2x96xf32> to vector<2x32xf32>
    %177 = vector.extract_strided_slice %173 {offsets = [0, 32], sizes = [2, 32], strides = [1, 1]} : vector<2x96xf32> to vector<2x32xf32>
    %178 = vector.extract_strided_slice %173 {offsets = [0, 64], sizes = [2, 32], strides = [1, 1]} : vector<2x96xf32> to vector<2x32xf32>
    %179 = arith.mulf %177, %155 : vector<2x32xf32>
    %180 = arith.mulf %176, %175 : vector<2x32xf32>
    %181 = arith.addf %179, %180 : vector<2x32xf32>
    %182 = math.tanh %181 : vector<2x32xf32>
    %183 = arith.mulf %178, %182 : vector<2x32xf32>
    %c0_59 = arith.constant 0 : index
    %184 = arith.index_cast %c6_i32 : i32 to index
    %c0_60 = arith.constant 0 : index
    %c0_61 = arith.constant 0 : index
    %185 = vector.load %arg4[%c0_59, %184, %c0_60, %c0_61] : memref<1x8x2x32xf32, #tpu.memory_space<vmem>>, vector<1x1x2x32xf32>
    %186 = vector.shape_cast %185 : vector<1x1x2x32xf32> to vector<2x32xf32>
    %187 = vector.shape_cast %183 : vector<2x32xf32> to vector<1x1x2x32xf32>
    tpu.vector_store %arg4[%c0_59, %184, %c0_60, %c0_61], %187 {strides = array<i32>} : memref<1x8x2x32xf32, #tpu.memory_space<vmem>>, vector<1x1x2x32xf32>,
    %c7_i32 = arith.constant 7 : i32
    %c0_62 = arith.constant 0 : index
    %188 = arith.index_cast %c7_i32 : i32 to index
    %c0_63 = arith.constant 0 : index
    %c0_64 = arith.constant 0 : index
    %189 = vector.load %arg2[%c0_62, %188, %c0_63, %c0_64] : memref<1x8x2x128xf32, #tpu.memory_space<vmem>>, vector<1x1x2x128xf32>
    %190 = vector.shape_cast %189 : vector<1x1x2x128xf32> to vector<2x128xf32>
    %191 = arith.truncf %183 : vector<2x32xf32> to vector<2x32xbf16>
    %cst_65 = arith.constant dense<0.000000e+00> : vector<2x128xf32>
    %192 = tpu.matmul %191, %3, %cst_65 {dimension_numbers = #tpu.dot_dimension_numbers<[1], [0], [0], [1], [0, 0, 1, 1], [], []>} : vector<2x32xbf16>, vector<32x128xbf16>, vector<2x128xf32> -> vector<2x128xf32>
    %193 = arith.addf %190, %192 : vector<2x128xf32>
    %194 = vector.extract_strided_slice %193 {offsets = [0, 0], sizes = [2, 96], strides = [1, 1]} : vector<2x128xf32> to vector<2x96xf32>
    %195 = arith.negf %194 : vector<2x96xf32>
    %196 = math.exp %195 : vector<2x96xf32>
    %cst_66 = arith.constant 1.000000e+00 : f32
    %197 = vector.broadcast %cst_66 : f32 to vector<2x96xf32>
    %198 = arith.addf %197, %196 : vector<2x96xf32>
    %199 = arith.divf %197, %198 : vector<2x96xf32>
    %200 = vector.extract_strided_slice %193 {offsets = [0, 96], sizes = [2, 32], strides = [1, 1]} : vector<2x128xf32> to vector<2x32xf32>
    %201 = math.tanh %200 : vector<2x32xf32>
    %202 = vector.extract_strided_slice %199 {offsets = [0, 0], sizes = [2, 32], strides = [1, 1]} : vector<2x96xf32> to vector<2x32xf32>
    %203 = vector.extract_strided_slice %199 {offsets = [0, 32], sizes = [2, 32], strides = [1, 1]} : vector<2x96xf32> to vector<2x32xf32>
    %204 = vector.extract_strided_slice %199 {offsets = [0, 64], sizes = [2, 32], strides = [1, 1]} : vector<2x96xf32> to vector<2x32xf32>
    %205 = arith.mulf %203, %181 : vector<2x32xf32>
    %206 = arith.mulf %202, %201 : vector<2x32xf32>
    %207 = arith.addf %205, %206 : vector<2x32xf32>
    %208 = math.tanh %207 : vector<2x32xf32>
    %209 = arith.mulf %204, %208 : vector<2x32xf32>
    %c0_67 = arith.constant 0 : index
    %210 = arith.index_cast %c7_i32 : i32 to index
    %c0_68 = arith.constant 0 : index
    %c0_69 = arith.constant 0 : index
    %211 = vector.load %arg4[%c0_67, %210, %c0_68, %c0_69] : memref<1x8x2x32xf32, #tpu.memory_space<vmem>>, vector<1x1x2x32xf32>
    %212 = vector.shape_cast %211 : vector<1x1x2x32xf32> to vector<2x32xf32>
    %213 = vector.shape_cast %209 : vector<2x32xf32> to vector<1x1x2x32xf32>
    tpu.vector_store %arg4[%c0_67, %210, %c0_68, %c0_69], %213 {strides = array<i32>} : memref<1x8x2x32xf32, #tpu.memory_space<vmem>>, vector<1x1x2x32xf32>,
    %c8_i32 = arith.constant 8 : i32
    %c0_70 = arith.constant 0 : index
    %c0_71 = arith.constant 0 : index
    %214 = vector.load %arg5[%c0_70, %c0_71] : memref<2x32xf32, #tpu.memory_space<vmem>>, vector<2x32xf32>
    tpu.vector_store %arg5[%c0_70, %c0_71], %209 {strides = array<i32>} : memref<2x32xf32, #tpu.memory_space<vmem>>, vector<2x32xf32>,
    %c0_72 = arith.constant 0 : index
    %c0_73 = arith.constant 0 : index
    %215 = vector.load %arg6[%c0_72, %c0_73] : memref<2x32xf32, #tpu.memory_space<vmem>>, vector<2x32xf32>
    tpu.vector_store %arg6[%c0_72, %c0_73], %207 {strides = array<i32>} : memref<2x32xf32, #tpu.memory_space<vmem>>, vector<2x32xf32>,
    return
  }
  func.func @transform_0(%arg0: i32, %arg1: i32) -> (i32, i32, i32, i32) {
    %c0_i32 = arith.constant 0 : i32
    %c0_i32_0 = arith.constant 0 : i32
    %c0_i32_1 = arith.constant 0 : i32
    return %arg0, %arg1, %c0_i32, %c0_i32_0 : i32, i32, i32, i32
  }
  func.func @transform_1(%arg0: i32, %arg1: i32) -> (i32, i32) {
    %c0_i32 = arith.constant 0 : i32
    %c0_i32_0 = arith.constant 0 : i32
    %c0_i32_1 = arith.constant 0 : i32
    return %c0_i32, %c0_i32_0 : i32, i32
  }
  func.func @transform_2(%arg0: i32, %arg1: i32) -> (i32, i32, i32, i32) {
    %c0_i32 = arith.constant 0 : i32
    %c0_i32_0 = arith.constant 0 : i32
    %c0_i32_1 = arith.constant 0 : i32
    return %arg0, %arg1, %c0_i32, %c0_i32_0 : i32, i32, i32, i32
  }
}

</mosaic_0001>

<llo_original>
// kernel: encoder_forward.2
$region0: #{encoder_forward.2}
  #allocation0 [shape = 'u32[]', space=smem, size = 0x4, offset = 0x4, fixed_abs, tag = 'smem constant byte address 0x4 - core index']
  #allocation1 [shape = 'u32[144,128]{1,0:T(1,128)}', space=vmem, size = 0x12000, scoped, tag = 'internal scratch']
  %s0 = inlined_call_operand.vmem [shape: bf16[64,32], index: 0, kind: input, shape index: {}]
  %s1 = inlined_call_operand.vmem [shape: bf16[32,32], index: 1, kind: input, shape index: {}]
  %s2 = inlined_call_operand.vmem [shape: f32[1,32], index: 2, kind: input, shape index: {}]
  %s3 = inlined_call_operand.vmem [shape: bf16[32,64], index: 3, kind: input, shape index: {}]
  %s4 = inlined_call_operand.vmem [shape: f32[1,64], index: 4, kind: input, shape index: {}]
  %s5 = inlined_call_operand.vmem [shape: bf16[32,64], index: 5, kind: input, shape index: {}]
  %s6 = inlined_call_operand.vmem [shape: f32[1,64], index: 6, kind: input, shape index: {}]
  %s7 = inlined_call_operand.vmem [shape: bf16[32,128], index: 7, kind: input, shape index: {}]
  %s8 = inlined_call_operand.vmem [shape: f32[1,128], index: 8, kind: input, shape index: {}]
  %s9 = inlined_call_operand.vmem [shape: f32[64,128], index: 9, kind: output, shape index: {}]
  %s10 = sld [smem:[#allocation0]]
  $region69: #{encoder_forward.2} parent=0
    _
  %s12 = ssub.s32 1, %s10
  %s13 = scalar_select 0, %s12, %s10
  loop: start=0, step=1, limit=4
  $region2: #{encoder_forward.2} parent=0 // loop_pre_header
    _
  $region3: #{encoder_forward.2} parent=0 // loop_header
    %s15 = sphi 0, %s19
    %p16 = scmp.ge.s32.totalorder %s15, 4
    %s25 = sphi 0, %s27
    %s28 = sphi 0, %s25
    %s29 = sphi 0, %s28
    %s45 = sphi 0, %s29
    %s49 = sphi 0, %s49
    %s51 = sphi 0, %s49
    %s52 = sphi 0, %s51
    %s66 = sphi 0, %s52
    %s70 = sphi 0, %s70
    %s72 = sphi 0, %s70
    %s73 = sphi 0, %s72
    %s87 = sphi 0, %s73
    %s91 = sphi 0, %s91
    %s93 = sphi 0, %s91
    %s94 = sphi 0, %s93
    %s108 = sphi 0, %s94
    %s112 = sphi 0, %s112
    %s114 = sphi 0, %s112
    %s115 = sphi 0, %s114
    %s129 = sphi 0, %s115
    %s133 = sphi 0, %s133
    %s135 = sphi 0, %s133
    %s136 = sphi 0, %s135
    %s150 = sphi 0, %s136
    %s154 = sphi 0, %s154
    %s156 = sphi 0, %s154
    %s157 = sphi 0, %s156
    %s171 = sphi 0, %s157
    %s175 = sphi 0, %s175
    %s177 = sphi 0, %s175
    %s178 = sphi 0, %s177
    %s192 = sphi 0, %s178
    %s196 = sphi 0, %s196
    %s198 = sphi 0, %s196
    %s199 = sphi 0, %s198
    %s213 = sphi 0, %s199
    %s219 = sphi 0, %s221
    %s222 = sphi 0, %s219
    %s223 = sphi 0, %s222
    %s239 = sphi 0, %s223
  $region4: #{encoder_forward.2} parent=0 // loop_header_branch
    %18 = sbr.rel (%p16) target = $region8
  $region5: #{encoder_forward.2} parent=0 // loop_body
    %s20 = ssub.s32 %s15, 1
    %s21 = ssub.s32 %s15, 2
    %s22 = sadd.s32 %s15, 1
    %s23 = ssub.s32 %s15, %s22
    %p24 = scmp.eq.s32.totalorder %s23, 0
    %s26 = sadd.s32 %s25, 1
    %s27 = scalar_select %p24, %s25, %s26
    %p30 = pneg %p24
    %p31 = scmp.eq.s32.totalorder %s15, 1
    %p32 = por %p30, %p31
    %p33 = scmp.ne.s32.totalorder %s25, %s28
    %p34 = scmp.eq.s32.totalorder %s15, 0
    %p35 = por %p33, %p34
    %p36 = scmp.ne.s32.totalorder %s25, %s28
    %p37 = scmp.eq.s32.totalorder %s20, 1
    %p38 = por %p36, %p37
    %p39 = scmp.ne.s32.totalorder %s28, %s29
    %p40 = scmp.eq.s32.totalorder %s20, 0
    %p41 = por %p39, %p40
    %p42 = scmp.ne.s32.totalorder %s28, %s29
    %p43 = scmp.eq.s32.totalorder %s21, 1
    %p44 = por %p42, %p43
    %p46 = scmp.ne.s32.totalorder %s29, %s45
    %p47 = scmp.eq.s32.totalorder %s21, 0
    %p48 = por %p46, %p47
    %s50 = sadd.s32 %s49, 1
    %p53 = scmp.eq.s32.totalorder %s15, 1
    %p54 = scmp.ne.s32.totalorder %s49, %s51
    %p55 = scmp.eq.s32.totalorder %s15, 0
    %p56 = por %p54, %p55
    %p57 = scmp.ne.s32.totalorder %s49, %s51
    %p58 = scmp.eq.s32.totalorder %s20, 1
    %p59 = por %p57, %p58
    %p60 = scmp.ne.s32.totalorder %s51, %s52
    %p61 = scmp.eq.s32.totalorder %s20, 0
    %p62 = por %p60, %p61
    %p63 = scmp.ne.s32.totalorder %s51, %s52
    %p64 = scmp.eq.s32.totalorder %s21, 1
    %p65 = por %p63, %p64
    %p67 = scmp.ne.s32.totalorder %s52, %s66
    %p68 = scmp.eq.s32.totalorder %s21, 0
    %p69 = por %p67, %p68
    %s71 = sadd.s32 %s70, 1
    %p74 = scmp.eq.s32.totalorder %s15, 1
    %p75 = scmp.ne.s32.totalorder %s70, %s72
    %p76 = scmp.eq.s32.totalorder %s15, 0
    %p77 = por %p75, %p76
    %p78 = scmp.ne.s32.totalorder %s70, %s72
    %p79 = scmp.eq.s32.totalorder %s20, 1
    %p80 = por %p78, %p79
    %p81 = scmp.ne.s32.totalorder %s72, %s73
    %p82 = scmp.eq.s32.totalorder %s20, 0
    %p83 = por %p81, %p82
    %p84 = scmp.ne.s32.totalorder %s72, %s73
    %p85 = scmp.eq.s32.totalorder %s21, 1
    %p86 = por %p84, %p85
    %p88 = scmp.ne.s32.totalorder %s73, %s87
    %p89 = scmp.eq.s32.totalorder %s21, 0
    %p90 = por %p88, %p89
    %s92 = sadd.s32 %s91, 1
    %p95 = scmp.eq.s32.totalorder %s15, 1
    %p96 = scmp.ne.s32.totalorder %s91, %s93
    %p97 = scmp.eq.s32.totalorder %s15, 0
    %p98 = por %p96, %p97
    %p99 = scmp.ne.s32.totalorder %s91, %s93
    %p100 = scmp.eq.s32.totalorder %s20, 1
    %p101 = por %p99, %p100
    %p102 = scmp.ne.s32.totalorder %s93, %s94
    %p103 = scmp.eq.s32.totalorder %s20, 0
    %p104 = por %p102, %p103
    %p105 = scmp.ne.s32.totalorder %s93, %s94
    %p106 = scmp.eq.s32.totalorder %s21, 1
    %p107 = por %p105, %p106
    %p109 = scmp.ne.s32.totalorder %s94, %s108
    %p110 = scmp.eq.s32.totalorder %s21, 0
    %p111 = por %p109, %p110
    %s113 = sadd.s32 %s112, 1
    %p116 = scmp.eq.s32.totalorder %s15, 1
    %p117 = scmp.ne.s32.totalorder %s112, %s114
    %p118 = scmp.eq.s32.totalorder %s15, 0
    %p119 = por %p117, %p118
    %p120 = scmp.ne.s32.totalorder %s112, %s114
    %p121 = scmp.eq.s32.totalorder %s20, 1
    %p122 = por %p120, %p121
    %p123 = scmp.ne.s32.totalorder %s114, %s115
    %p124 = scmp.eq.s32.totalorder %s20, 0
    %p125 = por %p123, %p124
    %p126 = scmp.ne.s32.totalorder %s114, %s115
    %p127 = scmp.eq.s32.totalorder %s21, 1
    %p128 = por %p126, %p127
    %p130 = scmp.ne.s32.totalorder %s115, %s129
    %p131 = scmp.eq.s32.totalorder %s21, 0
    %p132 = por %p130, %p131
    %s134 = sadd.s32 %s133, 1
    %p137 = scmp.eq.s32.totalorder %s15, 1
    %p138 = scmp.ne.s32.totalorder %s133, %s135
    %p139 = scmp.eq.s32.totalorder %s15, 0
    %p140 = por %p138, %p139
    %p141 = scmp.ne.s32.totalorder %s133, %s135
    %p142 = scmp.eq.s32.totalorder %s20, 1
    %p143 = por %p141, %p142
    %p144 = scmp.ne.s32.totalorder %s135, %s136
    %p145 = scmp.eq.s32.totalorder %s20, 0
    %p146 = por %p144, %p145
    %p147 = scmp.ne.s32.totalorder %s135, %s136
    %p148 = scmp.eq.s32.totalorder %s21, 1
    %p149 = por %p147, %p148
    %p151 = scmp.ne.s32.totalorder %s136, %s150
    %p152 = scmp.eq.s32.totalorder %s21, 0
    %p153 = por %p151, %p152
    %s155 = sadd.s32 %s154, 1
    %p158 = scmp.eq.s32.totalorder %s15, 1
    %p159 = scmp.ne.s32.totalorder %s154, %s156
    %p160 = scmp.eq.s32.totalorder %s15, 0
    %p161 = por %p159, %p160
    %p162 = scmp.ne.s32.totalorder %s154, %s156
    %p163 = scmp.eq.s32.totalorder %s20, 1
    %p164 = por %p162, %p163
    %p165 = scmp.ne.s32.totalorder %s156, %s157
    %p166 = scmp.eq.s32.totalorder %s20, 0
    %p167 = por %p165, %p166
    %p168 = scmp.ne.s32.totalorder %s156, %s157
    %p169 = scmp.eq.s32.totalorder %s21, 1
    %p170 = por %p168, %p169
    %p172 = scmp.ne.s32.totalorder %s157, %s171
    %p173 = scmp.eq.s32.totalorder %s21, 0
    %p174 = por %p172, %p173
    %s176 = sadd.s32 %s175, 1
    %p179 = scmp.eq.s32.totalorder %s15, 1
    %p180 = scmp.ne.s32.totalorder %s175, %s177
    %p181 = scmp.eq.s32.totalorder %s15, 0
    %p182 = por %p180, %p181
    %p183 = scmp.ne.s32.totalorder %s175, %s177
    %p184 = scmp.eq.s32.totalorder %s20, 1
    %p185 = por %p183, %p184
    %p186 = scmp.ne.s32.totalorder %s177, %s178
    %p187 = scmp.eq.s32.totalorder %s20, 0
    %p188 = por %p186, %p187
    %p189 = scmp.ne.s32.totalorder %s177, %s178
    %p190 = scmp.eq.s32.totalorder %s21, 1
    %p191 = por %p189, %p190
    %p193 = scmp.ne.s32.totalorder %s178, %s192
    %p194 = scmp.eq.s32.totalorder %s21, 0
    %p195 = por %p193, %p194
    %s197 = sadd.s32 %s196, 1
    %p200 = scmp.eq.s32.totalorder %s15, 1
    %p201 = scmp.ne.s32.totalorder %s196, %s198
    %p202 = scmp.eq.s32.totalorder %s15, 0
    %p203 = por %p201, %p202
    %p204 = scmp.ne.s32.totalorder %s196, %s198
    %p205 = scmp.eq.s32.totalorder %s20, 1
    %p206 = por %p204, %p205
    %p207 = scmp.ne.s32.totalorder %s198, %s199
    %p208 = scmp.eq.s32.totalorder %s20, 0
    %p209 = por %p207, %p208
    %p210 = scmp.ne.s32.totalorder %s198, %s199
    %p211 = scmp.eq.s32.totalorder %s21, 1
    %p212 = por %p210, %p211
    %p214 = scmp.ne.s32.totalorder %s199, %s213
    %p215 = scmp.eq.s32.totalorder %s21, 0
    %p216 = por %p214, %p215
    %s217 = ssub.s32 %s15, %s22
    %p218 = scmp.eq.s32.totalorder %s217, 0
    %s220 = sadd.s32 %s219, 1
    %s221 = scalar_select %p218, %s219, %s220
    %p224 = pneg %p218
    %p225 = scmp.eq.s32.totalorder %s15, 1
    %p226 = por %p224, %p225
    %p227 = scmp.ne.s32.totalorder %s219, %s222
    %p228 = scmp.eq.s32.totalorder %s15, 0
    %p229 = por %p227, %p228
    %p230 = scmp.ne.s32.totalorder %s219, %s222
    %p231 = scmp.eq.s32.totalorder %s20, 1
    %p232 = por %p230, %p231
    %p233 = scmp.ne.s32.totalorder %s222, %s223
    %p234 = scmp.eq.s32.totalorder %s20, 0
    %p235 = por %p233, %p234
    %p236 = scmp.ne.s32.totalorder %s222, %s223
    %p237 = scmp.eq.s32.totalorder %s21, 1
    %p238 = por %p236, %p237
    %p240 = scmp.ne.s32.totalorder %s223, %s239
    %p241 = scmp.eq.s32.totalorder %s21, 0
    %p242 = por %p240, %p241
    %p243 = scmp.le.s32.totalorder 1, %s15
    %p244 = scmp.lt.s32.totalorder %s15, 3
    %p245 = pnand %p243, %p244
    %p246 = pneg %p245
    // Predicated region
    $region9: #{encoder_forward.2} parent=5 // pred_check
      _
    $region10: #{encoder_forward.2} parent=5 // pred_check_branch
      %248 = sbr.rel (%p245) target = $region12
    $region11: #{encoder_forward.2} parent=5 // pred_region
      %s249 = ssub.s32 %s15, 1
      // Predicated region
      $region13: #{encoder_forward.2} parent=11 // pred_check
        %p250 = pneg %p62
      $region14: #{encoder_forward.2} parent=11 // pred_check_branch
        %252 = sbr.rel (%p250) target = $region16
      $region15: #{encoder_forward.2} parent=11 // pred_region
        _
      $region16: #{encoder_forward.2} parent=11 // pred_fallthru
        _
      // Predicated region
      $region17: #{encoder_forward.2} parent=11 // pred_check
        %p253 = pneg %p83
      $region18: #{encoder_forward.2} parent=11 // pred_check_branch
        %255 = sbr.rel (%p253) target = $region20
      $region19: #{encoder_forward.2} parent=11 // pred_region
        _
      $region20: #{encoder_forward.2} parent=11 // pred_fallthru
        _
      // Predicated region
      $region21: #{encoder_forward.2} parent=11 // pred_check
        %p256 = pneg %p104
      $region22: #{encoder_forward.2} parent=11 // pred_check_branch
        %258 = sbr.rel (%p256) target = $region24
      $region23: #{encoder_forward.2} parent=11 // pred_region
        _
      $region24: #{encoder_forward.2} parent=11 // pred_fallthru
        _
      // Predicated region
      $region25: #{encoder_forward.2} parent=11 // pred_check
        %p259 = pneg %p125
      $region26: #{encoder_forward.2} parent=11 // pred_check_branch
        %261 = sbr.rel (%p259) target = $region28
      $region27: #{encoder_forward.2} parent=11 // pred_region
        _
      $region28: #{encoder_forward.2} parent=11 // pred_fallthru
        _
      // Predicated region
      $region29: #{encoder_forward.2} parent=11 // pred_check
        %p262 = pneg %p146
      $region30: #{encoder_forward.2} parent=11 // pred_check_branch
        %264 = sbr.rel (%p262) target = $region32
      $region31: #{encoder_forward.2} parent=11 // pred_region
        _
      $region32: #{encoder_forward.2} parent=11 // pred_fallthru
        _
      // Predicated region
      $region33: #{encoder_forward.2} parent=11 // pred_check
        %p265 = pneg %p167
      $region34: #{encoder_forward.2} parent=11 // pred_check_branch
        %267 = sbr.rel (%p265) target = $region36
      $region35: #{encoder_forward.2} parent=11 // pred_region
        _
      $region36: #{encoder_forward.2} parent=11 // pred_fallthru
        _
      // Predicated region
      $region37: #{encoder_forward.2} parent=11 // pred_check
        %p268 = pneg %p188
      $region38: #{encoder_forward.2} parent=11 // pred_check_branch
        %270 = sbr.rel (%p268) target = $region40
      $region39: #{encoder_forward.2} parent=11 // pred_region
        _
      $region40: #{encoder_forward.2} parent=11 // pred_fallthru
        _
      // Predicated region
      $region41: #{encoder_forward.2} parent=11 // pred_check
        %p271 = pneg %p209
      $region42: #{encoder_forward.2} parent=11 // pred_check_branch
        %273 = sbr.rel (%p271) target = $region44
      $region43: #{encoder_forward.2} parent=11 // pred_region
        _
      $region44: #{encoder_forward.2} parent=11 // pred_fallthru
        _
    $region12: #{encoder_forward.2} parent=5 // pred_fallthru
      _
    %p274 = scmp.lt.s32.totalorder %s15, 2
    // Predicated region
    $region45: #{encoder_forward.2} parent=5 // pred_check
      %p275 = pneg %p274
    $region46: #{encoder_forward.2} parent=5 // pred_check_branch
      %277 = sbr.rel (%p275) target = $region48
    $region47: #{encoder_forward.2} parent=5 // pred_region
      // Predicated region
      $region49: #{encoder_forward.2} parent=47 // pred_check
        %p278 = pneg %p35
      $region50: #{encoder_forward.2} parent=47 // pred_check_branch
        %280 = sbr.rel (%p278) target = $region52
      $region51: #{encoder_forward.2} parent=47 // pred_region
        %s281 = smul.u32 4, %s15
        %p282 = scmp.lt.s32.totalorder %s281, 7
        %s283 = scalar_select %p282, %s281, 7
        %s284 = smul.addr %s283, 4
        %s285 = scalar_lea.vmem %s0, %s284
        %s286 = smul.u32 4, %s15
      $region52: #{encoder_forward.2} parent=47 // pred_fallthru
        _
    $region48: #{encoder_forward.2} parent=5 // pred_fallthru
      _
    %p287 = scmp.le.s32.totalorder 1, %s15
    %p288 = scmp.lt.s32.totalorder %s15, 3
    %p289 = pnand %p287, %p288
    %p290 = pneg %p289
    // Predicated region
    $region53: #{encoder_forward.2} parent=5 // pred_check
      _
    $region54: #{encoder_forward.2} parent=5 // pred_check_branch
      %292 = sbr.rel (%p289) target = $region56
    $region55: #{encoder_forward.2} parent=5 // pred_region
      %s293 = ssub.s32 %s15, 1
      %s294 = smul.u32 4, %s20
      %p295 = scmp.lt.s32.totalorder %s294, 7
      %s296 = scalar_select %p295, %s294, 7
      %s297 = smul.addr %s296, 4
      %s298 = scalar_lea.vmem %s0, %s297
      %p299 = pneg %p41
      %p300 = pneg %p38
      %p301 = pneg %p62
      %p302 = pneg %p59
      %p303 = pneg %p83
      %p304 = pneg %p80
      %p305 = pneg %p104
      %p306 = pneg %p101
      %p307 = pneg %p125
      %p308 = pneg %p122
      %p309 = pneg %p146
      %p310 = pneg %p143
      %p311 = pneg %p167
      %p312 = pneg %p164
      %p313 = pneg %p188
      %p314 = pneg %p185
      %p315 = pneg %p209
      %p316 = pneg %p206
      %p317 = pneg %p235
      %p318 = pneg %p232
      %s319 = smul.u32 4, %s20
      %p320 = scmp.lt.s32.totalorder %s319, 7
      %s321 = scalar_select %p320, %s319, 7
      %s322 = smul.addr %s321, 8
      %s323 = scalar_lea.vmem %s9, %s322
      %s324 = smul.u32 4, %s20
      %p325 = scmp.lt.s32.totalorder %s324, 7
      %s326 = scalar_select %p325, %s324, 7
      %s327 = smul.addr %s326, 4
      %s328 = scalar_lea.vmem %s0, %s327
      %s329 = smul.u32 4, %s20
      %s330 = smul.u32 4, %s20
      %p331 = scmp.lt.s32.totalorder %s330, 7
      %s332 = scalar_select %p331, %s330, 7
      %s333 = smul.addr %s332, 8
      %s334 = scalar_lea.vmem %s9, %s333
      %s335 = smul.u32 4, %s20
      %v337 = vld [vmem:[%s328] sm:$0xf]
      %v338 = vld [vmem:[%s328 + $0x4] sm:$0xf]
      %v339 = vld [vmem:[%s328 + $0x8] sm:$0xf]
      %v340 = vld [vmem:[%s328 + $0xc] sm:$0xf]
      %v341 = vld [vmem:[%s1] sm:$0xf]
      %v342 = vld [vmem:[%s1 + $0x4] sm:$0xf]
      %v343 = vld [vmem:[%s1 + $0x8] sm:$0xf]
      %v344 = vld [vmem:[%s1 + $0xc] sm:$0xf]
      %v345 = vld [vmem:[%s2] sm:$0x1]
      %v347 = vlaneseq
      %v348 = vshrl.u32 %v347, 7
      %v349 = vsub.s32 0, %v348
      %v350 = vrot.slane %v345, %v349
      %v356 = vunpack.c.l.b16 %v337
      %v357 = vunpack.c.l.b16 %v338
      %v358 = vunpack.c.l.b16 %v339
      %v359 = vunpack.c.l.b16 %v340
      %v360 = vpack.c.b16 %v357, %v356
      %v361 = vpack.c.b16 %v359, %v358
      %v366 = vunpack.c.l.b16 %v341
      %v367 = vunpack.c.l.b16 %v342
      %v368 = vunpack.c.l.b16 %v343
      %v369 = vunpack.c.l.b16 %v344
      %v370 = vpack.c.b16 %v367, %v366
      %v371 = vpack.c.b16 %v369, %v368
      %vm374 = vcmask 261120
      %v376 = vsel %vm374, %v360, 0
      %v379 = vsel %vm374, %v361, 0
      %381 = vmatprep.subr.bf16.mxu0 0
      %382 = vmatpush1.bf16.msra.mxu0 %v370
      %383 = vmatprep.subr.bf16.mxu0 0
      %384 = vmatpush1.bf16.msra.mxu0 %v371
      %385 = vmatprep.subr.bf16.mxu0 0
      %386 = vmatpush1.bf16.msra.mxu0 0
      %387 = vmatprep.subr.bf16.mxu0 0
      %388 = vmatpush1.bf16.msra.mxu0 0
      %389 = vmatprep.subr.bf16.mxu0 0
      %390 = vmatpush1.bf16.msra.mxu0 0
      %391 = vmatprep.subr.bf16.mxu0 0
      %392 = vmatpush1.bf16.msra.mxu0 0
      %393 = vmatprep.subr.bf16.mxu0 0
      %394 = vmatpush1.bf16.msra.mxu0 0
      %395 = vmatprep.subr.bf16.mxu0 0
      %396 = vmatpush1.bf16.msra.mxu0 0
      %397 = vmatprep.subr.bf16.mxu0 0
      %398 = vmatpush1.bf16.msra.mxu0 0
      %399 = vmatprep.subr.bf16.mxu0 0
      %400 = vmatpush1.bf16.msra.mxu0 0
      %401 = vmatprep.subr.bf16.mxu0 0
      %402 = vmatpush1.bf16.msra.mxu0 0
      %403 = vmatprep.subr.bf16.mxu0 0
      %404 = vmatpush1.bf16.msra.mxu0 0
      %405 = vmatprep.subr.bf16.mxu0 0
      %406 = vmatpush1.bf16.msra.mxu0 0
      %407 = vmatprep.subr.bf16.mxu0 0
      %408 = vmatpush1.bf16.msra.mxu0 0
      %409 = vmatprep.subr.bf16.mxu0 0
      %410 = vmatpush1.bf16.msra.mxu0 0
      %411 = vmatprep.subr.bf16.mxu0 0
      %412 = vmatpush1.bf16.msra.mxu0 0
      %413 = vmatprep.mubr.bf16.mxu0 0
      %414 = vmatmul.mubr.bf16.gmra.mrb[0].mxu0 %v376
      %v415 = vpop.f32.mrb[0].mxu0
      %v416 = vadd.f32 %v350, %v415
      %v417 = vpop.f32.mrb[0].mxu0
      %v418 = vpop.f32.mrb[0].mxu0
      %v419 = vadd.f32 %v350, %v418
      %v420 = vpop.f32.mrb[0].mxu0
      %421 = vmatprep.mubr.bf16.mxu0 0
      %422 = vmatmul.mubr.bf16.gmra.mrb[0].mxu0 %v379
      %v423 = vpop.f32.mrb[0].mxu0
      %v424 = vadd.f32 %v350, %v423
      %v425 = vpop.f32.mrb[0].mxu0
      %v426 = vpop.f32.mrb[0].mxu0
      %v427 = vadd.f32 %v350, %v426
      %v428 = vpop.f32.mrb[0].mxu0
      %429 = vdwg.mxu0
      %v430 = vpack.c.bf16 %v419, %v416
      %v431 = vpack.c.bf16 %v427, %v424
      %v432 = vld [vmem:[%s3] sm:$0xf]
      %v433 = vld [vmem:[%s3 + $0x4] sm:$0xf]
      %v434 = vld [vmem:[%s3 + $0x8] sm:$0xf]
      %v435 = vld [vmem:[%s3 + $0xc] sm:$0xf]
      %v436 = vld [vmem:[%s4] sm:$0x1]
      %v438 = vlaneseq
      %v439 = vshrl.u32 %v438, 7
      %v440 = vsub.s32 0, %v439
      %v441 = vrot.slane %v436, %v440
      %v447 = vunpack.c.l.b16 %v432
      %v448 = vunpack.c.l.b16 %v433
      %v449 = vunpack.c.l.b16 %v434
      %v450 = vunpack.c.l.b16 %v435
      %v451 = vpack.c.b16 %v448, %v447
      %v452 = vpack.c.b16 %v450, %v449
      %v456 = vsel %vm374, %v430, 0
      %v459 = vsel %vm374, %v431, 0
      %461 = vmatprep.subr.bf16.mxu0 0
      %462 = vmatpush1.bf16.msra.mxu0 %v451
      %463 = vmatprep.subr.bf16.mxu0 0
      %464 = vmatpush1.bf16.msra.mxu0 %v452
      %465 = vmatprep.subr.bf16.mxu0 0
      %466 = vmatpush1.bf16.msra.mxu0 0
      %467 = vmatprep.subr.bf16.mxu0 0
      %468 = vmatpush1.bf16.msra.mxu0 0
      %469 = vmatprep.subr.bf16.mxu0 0
      %470 = vmatpush1.bf16.msra.mxu0 0
      %471 = vmatprep.subr.bf16.mxu0 0
      %472 = vmatpush1.bf16.msra.mxu0 0
      %473 = vmatprep.subr.bf16.mxu0 0
      %474 = vmatpush1.bf16.msra.mxu0 0
      %475 = vmatprep.subr.bf16.mxu0 0
      %476 = vmatpush1.bf16.msra.mxu0 0
      %477 = vmatprep.subr.bf16.mxu0 0
      %478 = vmatpush1.bf16.msra.mxu0 0
      %479 = vmatprep.subr.bf16.mxu0 0
      %480 = vmatpush1.bf16.msra.mxu0 0
      %481 = vmatprep.subr.bf16.mxu0 0
      %482 = vmatpush1.bf16.msra.mxu0 0
      %483 = vmatprep.subr.bf16.mxu0 0
      %484 = vmatpush1.bf16.msra.mxu0 0
      %485 = vmatprep.subr.bf16.mxu0 0
      %486 = vmatpush1.bf16.msra.mxu0 0
      %487 = vmatprep.subr.bf16.mxu0 0
      %488 = vmatpush1.bf16.msra.mxu0 0
      %489 = vmatprep.subr.bf16.mxu0 0
      %490 = vmatpush1.bf16.msra.mxu0 0
      %491 = vmatprep.subr.bf16.mxu0 0
      %492 = vmatpush1.bf16.msra.mxu0 0
      %493 = vmatprep.mubr.bf16.mxu0 0
      %494 = vmatmul.mubr.bf16.gmra.mrb[0].mxu0 %v456
      %v495 = vpop.f32.mrb[0].mxu0
      %v496 = vadd.f32 %v441, %v495
      %v497 = vpop.f32.mrb[0].mxu0
      %v498 = vpop.f32.mrb[0].mxu0
      %v499 = vadd.f32 %v441, %v498
      %v500 = vpop.f32.mrb[0].mxu0
      %501 = vmatprep.mubr.bf16.mxu0 0
      %502 = vmatmul.mubr.bf16.gmra.mrb[0].mxu0 %v459
      %v503 = vpop.f32.mrb[0].mxu0
      %v504 = vadd.f32 %v441, %v503
      %v505 = vpop.f32.mrb[0].mxu0
      %v506 = vpop.f32.mrb[0].mxu0
      %v507 = vadd.f32 %v441, %v506
      %v508 = vpop.f32.mrb[0].mxu0
      %509 = vdwg.mxu0
      %v510 = vmax.f32 %v496, 0.0
      %v511 = vmax.f32 %v499, 0.0
      %v512 = vmax.f32 %v504, 0.0
      %v513 = vmax.f32 %v507, 0.0
      %v514 = vxor.u32 %v496, 2147483648
      %v515 = vxor.u32 %v499, 2147483648
      %v516 = vxor.u32 %v504, 2147483648
      %v517 = vxor.u32 %v507, 2147483648
      %v518 = vmul.f32 %v514, 1.442695
      %v519 = vpow.pop %v518
      %v520 = vmul.f32 %v515, 1.442695
      %v521 = vpow.pop %v520
      %v522 = vmul.f32 %v516, 1.442695
      %v523 = vpow.pop %v522
      %v524 = vmul.f32 %v517, 1.442695
      %v525 = vpow.pop %v524
      %v526 = vadd.f32 %v519, 1.0
      %v527 = vadd.f32 %v521, 1.0
      %v528 = vadd.f32 %v523, 1.0
      %v529 = vadd.f32 %v525, 1.0
      %v530 = vrcp.pop %v526
      %v531 = vmul.f32 1.0, %v530
      %v532 = vrcp.pop %v527
      %v533 = vmul.f32 1.0, %v532
      %v534 = vrcp.pop %v528
      %v535 = vmul.f32 1.0, %v534
      %v536 = vrcp.pop %v529
      %v537 = vmul.f32 1.0, %v536
      %542 = vrot.lane.b32.xlu0 %v510, 32
      %v543 = vpop.permute.xlu0 %542
      %544 = vrot.lane.b32.xlu0 %v511, 32
      %v545 = vpop.permute.xlu0 %544
      %546 = vrot.lane.b32.xlu0 %v512, 32
      %v547 = vpop.permute.xlu0 %546
      %548 = vrot.lane.b32.xlu0 %v513, 32
      %v549 = vpop.permute.xlu0 %548
      %v554 = vmul.f32 %v531, %v543
      %v555 = vmul.f32 %v533, %v545
      %v556 = vmul.f32 %v535, %v547
      %v557 = vmul.f32 %v537, %v549
      %v558 = vsub.f32 1.0, %v531
      %v559 = vsub.f32 1.0, %v533
      %v560 = vsub.f32 1.0, %v535
      %v561 = vsub.f32 1.0, %v537
      %566 = vrot.lane.b32.xlu0 %v416, 32
      %v567 = vpop.permute.xlu0 %566
      %568 = vrot.lane.b32.xlu0 %v419, 32
      %v569 = vpop.permute.xlu0 %568
      %570 = vrot.lane.b32.xlu0 %v424, 32
      %v571 = vpop.permute.xlu0 %570
      %572 = vrot.lane.b32.xlu0 %v427, 32
      %v573 = vpop.permute.xlu0 %572
      %v578 = vmul.f32 %v558, %v567
      %v579 = vmul.f32 %v559, %v569
      %v580 = vmul.f32 %v560, %v571
      %v581 = vmul.f32 %v561, %v573
      %v582 = vadd.f32 %v554, %v578
      %v583 = vadd.f32 %v555, %v579
      %v584 = vadd.f32 %v556, %v580
      %v585 = vadd.f32 %v557, %v581
      %v586 = vpack.c.bf16 %v583, %v582
      %v587 = vpack.c.bf16 %v585, %v584
      %v588 = vld [vmem:[%s5] sm:$0xf]
      %v589 = vld [vmem:[%s5 + $0x4] sm:$0xf]
      %v590 = vld [vmem:[%s5 + $0x8] sm:$0xf]
      %v591 = vld [vmem:[%s5 + $0xc] sm:$0xf]
      %v592 = vld [vmem:[%s6] sm:$0x1]
      %v594 = vlaneseq
      %v595 = vshrl.u32 %v594, 7
      %v596 = vsub.s32 0, %v595
      %v597 = vrot.slane %v592, %v596
      %601 = vrot.lane.b32.xlu0 %v586, 96
      %v602 = vpop.permute.xlu0 %601
      %603 = vrot.lane.b32.xlu0 %v587, 96
      %v604 = vpop.permute.xlu0 %603
      %v609 = vunpack.c.l.b16 %v588
      %v610 = vunpack.c.l.b16 %v589
      %v611 = vunpack.c.l.b16 %v590
      %v612 = vunpack.c.l.b16 %v591
      %v613 = vpack.c.b16 %v610, %v609
      %v614 = vpack.c.b16 %v612, %v611
      %v618 = vsel %vm374, %v602, 0
      %v621 = vsel %vm374, %v604, 0
      %623 = vmatprep.subr.bf16.mxu0 0
      %624 = vmatpush1.bf16.msra.mxu0 %v613
      %625 = vmatprep.subr.bf16.mxu0 0
      %626 = vmatpush1.bf16.msra.mxu0 %v614
      %627 = vmatprep.subr.bf16.mxu0 0
      %628 = vmatpush1.bf16.msra.mxu0 0
      %629 = vmatprep.subr.bf16.mxu0 0
      %630 = vmatpush1.bf16.msra.mxu0 0
      %631 = vmatprep.subr.bf16.mxu0 0
      %632 = vmatpush1.bf16.msra.mxu0 0
      %633 = vmatprep.subr.bf16.mxu0 0
      %634 = vmatpush1.bf16.msra.mxu0 0
      %635 = vmatprep.subr.bf16.mxu0 0
      %636 = vmatpush1.bf16.msra.mxu0 0
      %637 = vmatprep.subr.bf16.mxu0 0
      %638 = vmatpush1.bf16.msra.mxu0 0
      %639 = vmatprep.subr.bf16.mxu0 0
      %640 = vmatpush1.bf16.msra.mxu0 0
      %641 = vmatprep.subr.bf16.mxu0 0
      %642 = vmatpush1.bf16.msra.mxu0 0
      %643 = vmatprep.subr.bf16.mxu0 0
      %644 = vmatpush1.bf16.msra.mxu0 0
      %645 = vmatprep.subr.bf16.mxu0 0
      %646 = vmatpush1.bf16.msra.mxu0 0
      %647 = vmatprep.subr.bf16.mxu0 0
      %648 = vmatpush1.bf16.msra.mxu0 0
      %649 = vmatprep.subr.bf16.mxu0 0
      %650 = vmatpush1.bf16.msra.mxu0 0
      %651 = vmatprep.subr.bf16.mxu0 0
      %652 = vmatpush1.bf16.msra.mxu0 0
      %653 = vmatprep.subr.bf16.mxu0 0
      %654 = vmatpush1.bf16.msra.mxu0 0
      %655 = vmatprep.mubr.bf16.mxu0 0
      %656 = vmatmul.mubr.bf16.gmra.mrb[0].mxu0 %v618
      %v657 = vpop.f32.mrb[0].mxu0
      %v658 = vadd.f32 %v597, %v657
      %v659 = vpop.f32.mrb[0].mxu0
      %v660 = vpop.f32.mrb[0].mxu0
      %v661 = vadd.f32 %v597, %v660
      %v662 = vpop.f32.mrb[0].mxu0
      %663 = vmatprep.mubr.bf16.mxu0 0
      %664 = vmatmul.mubr.bf16.gmra.mrb[0].mxu0 %v621
      %v665 = vpop.f32.mrb[0].mxu0
      %v666 = vadd.f32 %v597, %v665
      %v667 = vpop.f32.mrb[0].mxu0
      %v668 = vpop.f32.mrb[0].mxu0
      %v669 = vadd.f32 %v597, %v668
      %v670 = vpop.f32.mrb[0].mxu0
      %671 = vdwg.mxu0
      %v672 = vmax.f32 %v658, 0.0
      %v673 = vmax.f32 %v661, 0.0
      %v674 = vmax.f32 %v666, 0.0
      %v675 = vmax.f32 %v669, 0.0
      %v676 = vxor.u32 %v658, 2147483648
      %v677 = vxor.u32 %v661, 2147483648
      %v678 = vxor.u32 %v666, 2147483648
      %v679 = vxor.u32 %v669, 2147483648
      %v680 = vmul.f32 %v676, 1.442695
      %v681 = vpow.pop %v680
      %v682 = vmul.f32 %v677, 1.442695
      %v683 = vpow.pop %v682
      %v684 = vmul.f32 %v678, 1.442695
      %v685 = vpow.pop %v684
      %v686 = vmul.f32 %v679, 1.442695
      %v687 = vpow.pop %v686
      %v688 = vadd.f32 %v681, 1.0
      %v689 = vadd.f32 %v683, 1.0
      %v690 = vadd.f32 %v685, 1.0
      %v691 = vadd.f32 %v687, 1.0
      %v692 = vrcp.pop %v688
      %v693 = vmul.f32 1.0, %v692
      %v694 = vrcp.pop %v689
      %v695 = vmul.f32 1.0, %v694
      %v696 = vrcp.pop %v690
      %v697 = vmul.f32 1.0, %v696
      %v698 = vrcp.pop %v691
      %v699 = vmul.f32 1.0, %v698
      %704 = vrot.lane.b32.xlu0 %v672, 32
      %v705 = vpop.permute.xlu0 %704
      %706 = vrot.lane.b32.xlu0 %v673, 32
      %v707 = vpop.permute.xlu0 %706
      %708 = vrot.lane.b32.xlu0 %v674, 32
      %v709 = vpop.permute.xlu0 %708
      %710 = vrot.lane.b32.xlu0 %v675, 32
      %v711 = vpop.permute.xlu0 %710
      %v716 = vmul.f32 %v693, %v705
      %v717 = vmul.f32 %v695, %v707
      %v718 = vmul.f32 %v697, %v709
      %v719 = vmul.f32 %v699, %v711
      %v720 = vsub.f32 1.0, %v693
      %v721 = vsub.f32 1.0, %v695
      %v722 = vsub.f32 1.0, %v697
      %v723 = vsub.f32 1.0, %v699
      %v724 = vmul.f32 %v720, %v582
      %v725 = vmul.f32 %v721, %v583
      %v726 = vmul.f32 %v722, %v584
      %v727 = vmul.f32 %v723, %v585
      %v728 = vadd.f32 %v716, %v724
      %v729 = vadd.f32 %v717, %v725
      %v730 = vadd.f32 %v718, %v726
      %v731 = vadd.f32 %v719, %v727
      %v732 = vpack.c.bf16 %v729, %v728
      %v733 = vpack.c.bf16 %v731, %v730
      %v734 = vld [vmem:[%s7] sm:$0xf]
      %v735 = vld [vmem:[%s7 + $0x4] sm:$0xf]
      %v736 = vld [vmem:[%s7 + $0x8] sm:$0xf]
      %v737 = vld [vmem:[%s7 + $0xc] sm:$0xf]
      %v738 = vld [vmem:[%s8] sm:$0x1]
      %v740 = vlaneseq
      %v741 = vshrl.u32 %v740, 7
      %v742 = vsub.s32 0, %v741
      %v743 = vrot.slane %v738, %v742
      %747 = vrot.lane.b32.xlu0 %v732, 96
      %v748 = vpop.permute.xlu0 %747
      %749 = vrot.lane.b32.xlu0 %v733, 96
      %v750 = vpop.permute.xlu0 %749
      %v755 = vunpack.c.l.b16 %v734
      %v756 = vunpack.c.l.b16 %v735
      %v757 = vunpack.c.l.b16 %v736
      %v758 = vunpack.c.l.b16 %v737
      %v759 = vpack.c.b16 %v756, %v755
      %v760 = vpack.c.b16 %v758, %v757
      %v764 = vsel %vm374, %v748, 0
      %v767 = vsel %vm374, %v750, 0
      %769 = vmatprep.subr.bf16.mxu0 0
      %770 = vmatpush1.bf16.msra.mxu0 %v759
      %771 = vmatprep.subr.bf16.mxu0 0
      %772 = vmatpush1.bf16.msra.mxu0 %v760
      %773 = vmatprep.subr.bf16.mxu0 0
      %774 = vmatpush1.bf16.msra.mxu0 0
      %775 = vmatprep.subr.bf16.mxu0 0
      %776 = vmatpush1.bf16.msra.mxu0 0
      %777 = vmatprep.subr.bf16.mxu0 0
      %778 = vmatpush1.bf16.msra.mxu0 0
      %779 = vmatprep.subr.bf16.mxu0 0
      %780 = vmatpush1.bf16.msra.mxu0 0
      %781 = vmatprep.subr.bf16.mxu0 0
      %782 = vmatpush1.bf16.msra.mxu0 0
      %783 = vmatprep.subr.bf16.mxu0 0
      %784 = vmatpush1.bf16.msra.mxu0 0
      %785 = vmatprep.subr.bf16.mxu0 0
      %786 = vmatpush1.bf16.msra.mxu0 0
      %787 = vmatprep.subr.bf16.mxu0 0
      %788 = vmatpush1.bf16.msra.mxu0 0
      %789 = vmatprep.subr.bf16.mxu0 0
      %790 = vmatpush1.bf16.msra.mxu0 0
      %791 = vmatprep.subr.bf16.mxu0 0
      %792 = vmatpush1.bf16.msra.mxu0 0
      %793 = vmatprep.subr.bf16.mxu0 0
      %794 = vmatpush1.bf16.msra.mxu0 0
      %795 = vmatprep.subr.bf16.mxu0 0
      %796 = vmatpush1.bf16.msra.mxu0 0
      %797 = vmatprep.subr.bf16.mxu0 0
      %798 = vmatpush1.bf16.msra.mxu0 0
      %799 = vmatprep.subr.bf16.mxu0 0
      %800 = vmatpush1.bf16.msra.mxu0 0
      %801 = vmatprep.mubr.bf16.mxu0 0
      %802 = vmatmul.mubr.bf16.gmra.mrb[0].mxu0 %v764
      %v803 = vpop.f32.mrb[0].mxu0
      %v804 = vadd.f32 %v743, %v803
      %v805 = vpop.f32.mrb[0].mxu0
      %v806 = vpop.f32.mrb[0].mxu0
      %v807 = vadd.f32 %v743, %v806
      %v808 = vpop.f32.mrb[0].mxu0
      %809 = vmatprep.mubr.bf16.mxu0 0
      %810 = vmatmul.mubr.bf16.gmra.mrb[0].mxu0 %v767
      %v811 = vpop.f32.mrb[0].mxu0
      %v812 = vadd.f32 %v743, %v811
      %v813 = vpop.f32.mrb[0].mxu0
      %v814 = vpop.f32.mrb[0].mxu0
      %v815 = vadd.f32 %v743, %v814
      %v816 = vpop.f32.mrb[0].mxu0
      %817 = vdwg.mxu0
      %818 = vst [vmem:[%s334] sm:$0xff] %v804
      %819 = vst [vmem:[%s334 + $0x8] sm:$0xff] %v807
      %820 = vst [vmem:[%s334 + $0x10] sm:$0xff] %v812
      %821 = vst [vmem:[%s334 + $0x18] sm:$0xff] %v815
      %s822 = smul.u32 4, %s20
      %p823 = scmp.lt.s32.totalorder %s822, 7
      %s824 = scalar_select %p823, %s822, 7
      %s825 = smul.addr %s824, 8
      %s826 = scalar_lea.vmem %s9, %s825
      // Predicated region
      $region57: #{encoder_forward.2} parent=55 // pred_check
        %p827 = pneg %p232
      $region58: #{encoder_forward.2} parent=55 // pred_check_branch
        %829 = sbr.rel (%p827) target = $region60
      $region59: #{encoder_forward.2} parent=55 // pred_region
        %s830 = smul.u32 4, %s20
      $region60: #{encoder_forward.2} parent=55 // pred_fallthru
        _
    $region56: #{encoder_forward.2} parent=5 // pred_fallthru
      _
    %p831 = scmp.le.s32.totalorder 2, %s15
    // Predicated region
    $region61: #{encoder_forward.2} parent=5 // pred_check
      %p832 = pneg %p831
    $region62: #{encoder_forward.2} parent=5 // pred_check_branch
      %834 = sbr.rel (%p832) target = $region64
    $region63: #{encoder_forward.2} parent=5 // pred_region
      %s835 = ssub.s32 %s15, 2
      // Predicated region
      $region65: #{encoder_forward.2} parent=63 // pred_check
        %p836 = pneg %p238
      $region66: #{encoder_forward.2} parent=63 // pred_check_branch
        %838 = sbr.rel (%p836) target = $region68
      $region67: #{encoder_forward.2} parent=63 // pred_region
        %s839 = smul.u32 4, %s21
        %p840 = scmp.lt.s32.totalorder %s839, 7
        %s841 = scalar_select %p840, %s839, 7
        %s842 = smul.addr %s841, 8
        %s843 = scalar_lea.vmem %s9, %s842
      $region68: #{encoder_forward.2} parent=63 // pred_fallthru
        _
    $region64: #{encoder_forward.2} parent=5 // pred_fallthru
      _
  $region6: #{encoder_forward.2} parent=0 // loop_footer
    %s19 = sadd.s32 1, %s15
  $region7: #{encoder_forward.2} parent=0 // loop_footer_branch
    %14 = sbr.rel target = $region3
  $region8: #{encoder_forward.2} parent=0 // loop_exit
    _

// kernel: encoder_forward.3
$region0: #{encoder_forward.3}
  #allocation0 [shape = 'u32[]', space=smem, size = 0x4, offset = 0x4, fixed_abs, tag = 'smem constant byte address 0x4 - core index']
  #allocation1 [shape = 'u32[144,128]{1,0:T(1,128)}', space=vmem, size = 0x12000, scoped, tag = 'internal scratch']
  #allocation2 [shape = 'f32[2,32]{1,0:T(2,128)}', space=vmem, size = 0x400, scoped, tag = 'scratch operand']
  #allocation3 [shape = 'f32[2,32]{1,0:T(2,128)}', space=vmem, size = 0x400, scoped, tag = 'scratch operand']
  %s0 = inlined_call_operand.vmem [shape: f32[2,16,2,128], index: 0, kind: input, shape index: {}]
  %s1 = inlined_call_operand.vmem [shape: bf16[32,128], index: 1, kind: input, shape index: {}]
  %s2 = inlined_call_operand.vmem [shape: f32[2,16,2,32], index: 2, kind: output, shape index: {}]
  %s3 = sld [smem:[#allocation0]]
  $region45: #{encoder_forward.3} parent=0
    _
  %s5 = ssub.s32 1, %s3
  %s6 = scalar_select 0, %s5, %s3
  loop: start=0, step=1, limit=6
  $region2: #{encoder_forward.3} parent=0 // loop_pre_header
    _
  $region3: #{encoder_forward.3} parent=0 // loop_header
    %s8 = sphi 0, %s12
    %p9 = scmp.ge.s32.totalorder %s8, 6
    %s15 = sphi 0, %s27
    %s16 = sphi 0, %s23
    %s17 = sphi 0, %s15
    %s18 = sphi 0, %s16
    %s19 = sphi 0, %s17
    %s20 = sphi 0, %s18
    %s32 = sphi 0, %s34
    %s35 = sphi 0, %s32
    %s36 = sphi 0, %s35
    %s52 = sphi 0, %s36
    %s56 = sphi 0, %s56
    %s58 = sphi 0, %s56
    %s59 = sphi 0, %s58
    %s73 = sphi 0, %s59
    %s81 = sphi 0, %s83
    %s84 = sphi 0, %s81
    %s85 = sphi 0, %s84
    %s101 = sphi 0, %s85
  $region4: #{encoder_forward.3} parent=0 // loop_header_branch
    %11 = sbr.rel (%p9) target = $region8
  $region5: #{encoder_forward.3} parent=0 // loop_body
    %s13 = ssub.s32 %s8, 1
    %s14 = ssub.s32 %s8, 2
    %s21 = sadd.s32 1, %s16
    %p22 = scmp.ge.s32.totalorder %s21, 2
    %s23 = scalar_select %p22, 0, %s21
    %s24 = sadd.s32 1, %s15
    %s25 = scalar_select %p22, %s24, %s15
    %p26 = scmp.ge.s32.totalorder %s25, 2
    %s27 = scalar_select %p26, 0, %s25
    %s28 = ssub.s32 %s15, %s27
    %s29 = ssub.s32 %s16, %s23
    %s30 = sor.u32 %s28, %s29
    %p31 = scmp.eq.s32.totalorder %s30, 0
    %s33 = sadd.s32 %s32, 1
    %s34 = scalar_select %p31, %s32, %s33
    %p37 = pneg %p31
    %p38 = scmp.eq.s32.totalorder %s8, 3
    %p39 = por %p37, %p38
    %p40 = scmp.ne.s32.totalorder %s32, %s35
    %p41 = scmp.eq.s32.totalorder %s8, 0
    %p42 = por %p40, %p41
    %p43 = scmp.ne.s32.totalorder %s32, %s35
    %p44 = scmp.eq.s32.totalorder %s13, 3
    %p45 = por %p43, %p44
    %p46 = scmp.ne.s32.totalorder %s35, %s36
    %p47 = scmp.eq.s32.totalorder %s13, 0
    %p48 = por %p46, %p47
    %p49 = scmp.ne.s32.totalorder %s35, %s36
    %p50 = scmp.eq.s32.totalorder %s14, 3
    %p51 = por %p49, %p50
    %p53 = scmp.ne.s32.totalorder %s36, %s52
    %p54 = scmp.eq.s32.totalorder %s14, 0
    %p55 = por %p53, %p54
    %s57 = sadd.s32 %s56, 1
    %p60 = scmp.eq.s32.totalorder %s8, 3
    %p61 = scmp.ne.s32.totalorder %s56, %s58
    %p62 = scmp.eq.s32.totalorder %s8, 0
    %p63 = por %p61, %p62
    %p64 = scmp.ne.s32.totalorder %s56, %s58
    %p65 = scmp.eq.s32.totalorder %s13, 3
    %p66 = por %p64, %p65
    %p67 = scmp.ne.s32.totalorder %s58, %s59
    %p68 = scmp.eq.s32.totalorder %s13, 0
    %p69 = por %p67, %p68
    %p70 = scmp.ne.s32.totalorder %s58, %s59
    %p71 = scmp.eq.s32.totalorder %s14, 3
    %p72 = por %p70, %p71
    %p74 = scmp.ne.s32.totalorder %s59, %s73
    %p75 = scmp.eq.s32.totalorder %s14, 0
    %p76 = por %p74, %p75
    %s77 = ssub.s32 %s15, %s27
    %s78 = ssub.s32 %s16, %s23
    %s79 = sor.u32 %s77, %s78
    %p80 = scmp.eq.s32.totalorder %s79, 0
    %s82 = sadd.s32 %s81, 1
    %s83 = scalar_select %p80, %s81, %s82
    %p86 = pneg %p80
    %p87 = scmp.eq.s32.totalorder %s8, 3
    %p88 = por %p86, %p87
    %p89 = scmp.ne.s32.totalorder %s81, %s84
    %p90 = scmp.eq.s32.totalorder %s8, 0
    %p91 = por %p89, %p90
    %p92 = scmp.ne.s32.totalorder %s81, %s84
    %p93 = scmp.eq.s32.totalorder %s13, 3
    %p94 = por %p92, %p93
    %p95 = scmp.ne.s32.totalorder %s84, %s85
    %p96 = scmp.eq.s32.totalorder %s13, 0
    %p97 = por %p95, %p96
    %p98 = scmp.ne.s32.totalorder %s84, %s85
    %p99 = scmp.eq.s32.totalorder %s14, 3
    %p100 = por %p98, %p99
    %p102 = scmp.ne.s32.totalorder %s85, %s101
    %p103 = scmp.eq.s32.totalorder %s14, 0
    %p104 = por %p102, %p103
    %p105 = scmp.le.s32.totalorder 1, %s8
    %p106 = scmp.lt.s32.totalorder %s8, 5
    %p107 = pnand %p105, %p106
    %p108 = pneg %p107
    // Predicated region
    $region9: #{encoder_forward.3} parent=5 // pred_check
      _
    $region10: #{encoder_forward.3} parent=5 // pred_check_branch
      %110 = sbr.rel (%p107) target = $region12
    $region11: #{encoder_forward.3} parent=5 // pred_region
      %s111 = ssub.s32 %s8, 1
      // Predicated region
      $region13: #{encoder_forward.3} parent=11 // pred_check
        %p112 = pneg %p69
      $region14: #{encoder_forward.3} parent=11 // pred_check_branch
        %114 = sbr.rel (%p112) target = $region16
      $region15: #{encoder_forward.3} parent=11 // pred_region
        _
      $region16: #{encoder_forward.3} parent=11 // pred_fallthru
        _
    $region12: #{encoder_forward.3} parent=5 // pred_fallthru
      _
    %p115 = scmp.lt.s32.totalorder %s8, 4
    // Predicated region
    $region17: #{encoder_forward.3} parent=5 // pred_check
      %p116 = pneg %p115
    $region18: #{encoder_forward.3} parent=5 // pred_check_branch
      %118 = sbr.rel (%p116) target = $region20
    $region19: #{encoder_forward.3} parent=5 // pred_region
      // Predicated region
      $region21: #{encoder_forward.3} parent=19 // pred_check
        %p119 = pneg %p42
      $region22: #{encoder_forward.3} parent=19 // pred_check_branch
        %121 = sbr.rel (%p119) target = $region24
      $region23: #{encoder_forward.3} parent=19 // pred_region
        %s122 = smul.u32 8, %s16
        %p123 = scmp.lt.s32.totalorder %s15, 1
        %s124 = scalar_select %p123, %s15, 1
        %p125 = scmp.lt.s32.totalorder %s122, 15
        %s126 = scalar_select %p125, %s122, 15
        %s127 = smul.addr %s124, 16
        %s128 = sadd.s32 %s126, %s127
        %s129 = smul.addr %s128, 2
        %s130 = scalar_lea.vmem %s0, %s129
        %s131 = smul.u32 8, %s16
      $region24: #{encoder_forward.3} parent=19 // pred_fallthru
        _
    $region20: #{encoder_forward.3} parent=5 // pred_fallthru
      _
    %p132 = scmp.le.s32.totalorder 1, %s8
    %p133 = scmp.lt.s32.totalorder %s8, 5
    %p134 = pnand %p132, %p133
    %p135 = pneg %p134
    // Predicated region
    $region25: #{encoder_forward.3} parent=5 // pred_check
      _
    $region26: #{encoder_forward.3} parent=5 // pred_check_branch
      %137 = sbr.rel (%p134) target = $region28
    $region27: #{encoder_forward.3} parent=5 // pred_region
      %s138 = ssub.s32 %s8, 1
      %s139 = smul.u32 8, %s18
      %p140 = scmp.lt.s32.totalorder %s17, 1
      %s141 = scalar_select %p140, %s17, 1
      %p142 = scmp.lt.s32.totalorder %s139, 15
      %s143 = scalar_select %p142, %s139, 15
      %s144 = smul.addr %s141, 16
      %s145 = sadd.s32 %s143, %s144
      %s146 = smul.addr %s145, 2
      %s147 = scalar_lea.vmem %s0, %s146
      %p148 = pneg %p48
      %p149 = pneg %p45
      %p150 = pneg %p69
      %p151 = pneg %p66
      %p152 = pneg %p97
      %p153 = pneg %p94
      %s154 = smul.u32 8, %s18
      %p155 = scmp.lt.s32.totalorder %s17, 1
      %s156 = scalar_select %p155, %s17, 1
      %p157 = scmp.lt.s32.totalorder %s154, 15
      %s158 = scalar_select %p157, %s154, 15
      %s159 = smul.addr %s156, 16
      %s160 = sadd.s32 %s158, %s159
      %s161 = smul.addr %s160, 2
      %s162 = scalar_lea.vmem %s2, %s161
      %s163 = smul.u32 8, %s18
      %p164 = scmp.lt.s32.totalorder %s17, 1
      %s165 = scalar_select %p164, %s17, 1
      %p166 = scmp.lt.s32.totalorder %s163, 15
      %s167 = scalar_select %p166, %s163, 15
      %s168 = smul.addr %s165, 16
      %s169 = sadd.s32 %s167, %s168
      %s170 = smul.addr %s169, 2
      %s171 = scalar_lea.vmem %s0, %s170
      %s172 = smul.u32 8, %s18
      %s173 = smul.u32 8, %s18
      %p174 = scmp.lt.s32.totalorder %s17, 1
      %s175 = scalar_select %p174, %s17, 1
      %p176 = scmp.lt.s32.totalorder %s173, 15
      %s177 = scalar_select %p176, %s173, 15
      %s178 = smul.addr %s175, 16
      %s179 = sadd.s32 %s177, %s178
      %s180 = smul.addr %s179, 2
      %s181 = scalar_lea.vmem %s2, %s180
      %s182 = smul.u32 8, %s18
      %p184 = scmp.eq.s32.totalorder %s18, 0
      // Predicated region
      $region29: #{encoder_forward.3} parent=27 // pred_check
        %p185 = pneg %p184
      $region30: #{encoder_forward.3} parent=27 // pred_check_branch
        %187 = sbr.rel (%p185) target = $region32
      $region31: #{encoder_forward.3} parent=27 // pred_region
        %vm188 = vcmask 254976
        %189 = vst.msk [vmem:[#allocation2] sm:$0x3] %vm188, 0.0
        %190 = vst.msk [vmem:[#allocation3] sm:$0x3] %vm188, 0.0
      $region32: #{encoder_forward.3} parent=27 // pred_fallthru
        _
      %v191 = vld [vmem:[%s1] sm:$0xf]
      %v192 = vld [vmem:[%s1 + $0x4] sm:$0xf]
      %v193 = vld [vmem:[%s1 + $0x8] sm:$0xf]
      %v194 = vld [vmem:[%s1 + $0xc] sm:$0xf]
      %v195 = vld [vmem:[#allocation2] sm:$0x3]
      %v196 = vld [vmem:[#allocation3] sm:$0x3]
      %v197 = vld [vmem:[%s171] sm:$0x3]
      %v198 = vpack.c.bf16 %v195, %v195
      %v203 = vunpack.c.l.b16 %v191
      %v204 = vunpack.c.l.b16 %v192
      %v205 = vunpack.c.l.b16 %v193
      %v206 = vunpack.c.l.b16 %v194
      %v207 = vpack.c.b16 %v204, %v203
      %v208 = vpack.c.b16 %v206, %v205
      %vm211 = vcmask 261120
      %v213 = vsel %vm211, %v198, 0
      %215 = vmatprep.subr.bf16.mxu0 0
      %216 = vmatpush1.bf16.msra.mxu0 %v207
      %217 = vmatprep.subr.bf16.mxu0 0
      %218 = vmatpush1.bf16.msra.mxu0 %v208
      %219 = vmatprep.subr.bf16.mxu0 0
      %220 = vmatpush1.bf16.msra.mxu0 0
      %221 = vmatprep.subr.bf16.mxu0 0
      %222 = vmatpush1.bf16.msra.mxu0 0
      %223 = vmatprep.subr.bf16.mxu0 0
      %224 = vmatpush1.bf16.msra.mxu0 0
      %225 = vmatprep.subr.bf16.mxu0 0
      %226 = vmatpush1.bf16.msra.mxu0 0
      %227 = vmatprep.subr.bf16.mxu0 0
      %228 = vmatpush1.bf16.msra.mxu0 0
      %229 = vmatprep.subr.bf16.mxu0 0
      %230 = vmatpush1.bf16.msra.mxu0 0
      %231 = vmatprep.subr.bf16.mxu0 0
      %232 = vmatpush1.bf16.msra.mxu0 0
      %233 = vmatprep.subr.bf16.mxu0 0
      %234 = vmatpush1.bf16.msra.mxu0 0
      %235 = vmatprep.subr.bf16.mxu0 0
      %236 = vmatpush1.bf16.msra.mxu0 0
      %237 = vmatprep.subr.bf16.mxu0 0
      %238 = vmatpush1.bf16.msra.mxu0 0
      %239 = vmatprep.subr.bf16.mxu0 0
      %240 = vmatpush1.bf16.msra.mxu0 0
      %241 = vmatprep.subr.bf16.mxu0 0
      %242 = vmatpush1.bf16.msra.mxu0 0
      %243 = vmatprep.subr.bf16.mxu0 0
      %244 = vmatpush1.bf16.msra.mxu0 0
      %245 = vmatprep.subr.bf16.mxu0 0
      %246 = vmatpush1.bf16.msra.mxu0 0
      %247 = vmatprep.mubr.bf16.mxu0 0
      %248 = vmatmul.mubr.bf16.gmra.mrb[0].mxu0 %v213
      %v249 = vpop.f32.mrb[0].mxu0
      %v250 = vadd.f32 0.0, %v249
      %v251 = vpop.f32.mrb[0].mxu0
      %v252 = vpop.f32.mrb[0].mxu0
      %v253 = vpop.f32.mrb[0].mxu0
      %254 = vdwg.mxu0
      %v255 = vadd.f32 %v197, %v250
      %v256 = vxor.u32 %v255, 2147483648
      %v257 = vmul.f32 %v256, 1.442695
      %v258 = vpow.pop %v257
      %v259 = vadd.f32 %v258, 1.0
      %v260 = vrcp.pop %v259
      %v261 = vmul.f32 1.0, %v260
      %v262 = vtanh.pop %v255
      %264 = vrot.lane.b32.xlu0 %v196, 32
      %v265 = vpop.permute.xlu0 %264
      %v267 = vmul.f32 %v261, %v265
      %269 = vrot.lane.b32.xlu0 %v262, 32
      %v270 = vpop.permute.xlu0 %269
      %v272 = vmul.f32 %v261, %v270
      %274 = vrot.lane.b32.xlu0 %v272, 32
      %v275 = vpop.permute.xlu0 %274
      %v277 = vadd.f32 %v267, %v275
      %v278 = vtanh.pop %v277
      %280 = vrot.lane.b32.xlu0 %v278, 32
      %v281 = vpop.permute.xlu0 %280
      %v283 = vmul.f32 %v261, %v281
      %285 = vrot.lane.b32.xlu0 %v283, 64
      %v286 = vpop.permute.xlu0 %285
      %vm288 = vcmask 254976
      %289 = vst.msk [vmem:[%s181] sm:$0x3] %vm288, %v286
      %s290 = scalar_lea.vmem %s171, 2
      %v291 = vld [vmem:[%s290] sm:$0x3]
      %v292 = vpack.c.bf16 %v283, %v283
      %294 = vrot.lane.b32.xlu0 %v292, 64
      %v295 = vpop.permute.xlu0 %294
      %v297 = vsel %vm211, %v295, 0
      %299 = vmatprep.subr.bf16.mxu0 0
      %300 = vmatpush1.bf16.msra.mxu0 %v207
      %301 = vmatprep.subr.bf16.mxu0 0
      %302 = vmatpush1.bf16.msra.mxu0 %v208
      %303 = vmatprep.subr.bf16.mxu0 0
      %304 = vmatpush1.bf16.msra.mxu0 0
      %305 = vmatprep.subr.bf16.mxu0 0
      %306 = vmatpush1.bf16.msra.mxu0 0
      %307 = vmatprep.subr.bf16.mxu0 0
      %308 = vmatpush1.bf16.msra.mxu0 0
      %309 = vmatprep.subr.bf16.mxu0 0
      %310 = vmatpush1.bf16.msra.mxu0 0
      %311 = vmatprep.subr.bf16.mxu0 0
      %312 = vmatpush1.bf16.msra.mxu0 0
      %313 = vmatprep.subr.bf16.mxu0 0
      %314 = vmatpush1.bf16.msra.mxu0 0
      %315 = vmatprep.subr.bf16.mxu0 0
      %316 = vmatpush1.bf16.msra.mxu0 0
      %317 = vmatprep.subr.bf16.mxu0 0
      %318 = vmatpush1.bf16.msra.mxu0 0
      %319 = vmatprep.subr.bf16.mxu0 0
      %320 = vmatpush1.bf16.msra.mxu0 0
      %321 = vmatprep.subr.bf16.mxu0 0
      %322 = vmatpush1.bf16.msra.mxu0 0
      %323 = vmatprep.subr.bf16.mxu0 0
      %324 = vmatpush1.bf16.msra.mxu0 0
      %325 = vmatprep.subr.bf16.mxu0 0
      %326 = vmatpush1.bf16.msra.mxu0 0
      %327 = vmatprep.subr.bf16.mxu0 0
      %328 = vmatpush1.bf16.msra.mxu0 0
      %329 = vmatprep.subr.bf16.mxu0 0
      %330 = vmatpush1.bf16.msra.mxu0 0
      %331 = vmatprep.mubr.bf16.mxu0 0
      %332 = vmatmul.mubr.bf16.gmra.mrb[0].mxu0 %v297
      %v333 = vpop.f32.mrb[0].mxu0
      %v334 = vadd.f32 0.0, %v333
      %v335 = vpop.f32.mrb[0].mxu0
      %v336 = vpop.f32.mrb[0].mxu0
      %v337 = vpop.f32.mrb[0].mxu0
      %338 = vdwg.mxu0
      %v339 = vadd.f32 %v291, %v334
      %v340 = vxor.u32 %v339, 2147483648
      %v341 = vmul.f32 %v340, 1.442695
      %v342 = vpow.pop %v341
      %v343 = vadd.f32 %v342, 1.0
      %v344 = vrcp.pop %v343
      %v345 = vmul.f32 1.0, %v344
      %v346 = vtanh.pop %v339
      %v347 = vmul.f32 %v345, %v277
      %349 = vrot.lane.b32.xlu0 %v346, 32
      %v350 = vpop.permute.xlu0 %349
      %v352 = vmul.f32 %v345, %v350
      %354 = vrot.lane.b32.xlu0 %v352, 32
      %v355 = vpop.permute.xlu0 %354
      %v357 = vadd.f32 %v347, %v355
      %v358 = vtanh.pop %v357
      %360 = vrot.lane.b32.xlu0 %v358, 32
      %v361 = vpop.permute.xlu0 %360
      %v363 = vmul.f32 %v345, %v361
      %365 = vrot.lane.b32.xlu0 %v363, 64
      %v366 = vpop.permute.xlu0 %365
      %s368 = scalar_lea.vmem %s181, 2
      %369 = vst.msk [vmem:[%s368] sm:$0x3] %vm288, %v366
      %s370 = scalar_lea.vmem %s171, 4
      %v371 = vld [vmem:[%s370] sm:$0x3]
      %v372 = vpack.c.bf16 %v363, %v363
      %374 = vrot.lane.b32.xlu0 %v372, 64
      %v375 = vpop.permute.xlu0 %374
      %v377 = vsel %vm211, %v375, 0
      %379 = vmatprep.subr.bf16.mxu0 0
      %380 = vmatpush1.bf16.msra.mxu0 %v207
      %381 = vmatprep.subr.bf16.mxu0 0
      %382 = vmatpush1.bf16.msra.mxu0 %v208
      %383 = vmatprep.subr.bf16.mxu0 0
      %384 = vmatpush1.bf16.msra.mxu0 0
      %385 = vmatprep.subr.bf16.mxu0 0
      %386 = vmatpush1.bf16.msra.mxu0 0
      %387 = vmatprep.subr.bf16.mxu0 0
      %388 = vmatpush1.bf16.msra.mxu0 0
      %389 = vmatprep.subr.bf16.mxu0 0
      %390 = vmatpush1.bf16.msra.mxu0 0
      %391 = vmatprep.subr.bf16.mxu0 0
      %392 = vmatpush1.bf16.msra.mxu0 0
      %393 = vmatprep.subr.bf16.mxu0 0
      %394 = vmatpush1.bf16.msra.mxu0 0
      %395 = vmatprep.subr.bf16.mxu0 0
      %396 = vmatpush1.bf16.msra.mxu0 0
      %397 = vmatprep.subr.bf16.mxu0 0
      %398 = vmatpush1.bf16.msra.mxu0 0
      %399 = vmatprep.subr.bf16.mxu0 0
      %400 = vmatpush1.bf16.msra.mxu0 0
      %401 = vmatprep.subr.bf16.mxu0 0
      %402 = vmatpush1.bf16.msra.mxu0 0
      %403 = vmatprep.subr.bf16.mxu0 0
      %404 = vmatpush1.bf16.msra.mxu0 0
      %405 = vmatprep.subr.bf16.mxu0 0
      %406 = vmatpush1.bf16.msra.mxu0 0
      %407 = vmatprep.subr.bf16.mxu0 0
      %408 = vmatpush1.bf16.msra.mxu0 0
      %409 = vmatprep.subr.bf16.mxu0 0
      %410 = vmatpush1.bf16.msra.mxu0 0
      %411 = vmatprep.mubr.bf16.mxu0 0
      %412 = vmatmul.mubr.bf16.gmra.mrb[0].mxu0 %v377
      %v413 = vpop.f32.mrb[0].mxu0
      %v414 = vadd.f32 0.0, %v413
      %v415 = vpop.f32.mrb[0].mxu0
      %v416 = vpop.f32.mrb[0].mxu0
      %v417 = vpop.f32.mrb[0].mxu0
      %418 = vdwg.mxu0
      %v419 = vadd.f32 %v371, %v414
      %v420 = vxor.u32 %v419, 2147483648
      %v421 = vmul.f32 %v420, 1.442695
      %v422 = vpow.pop %v421
      %v423 = vadd.f32 %v422, 1.0
      %v424 = vrcp.pop %v423
      %v425 = vmul.f32 1.0, %v424
      %v426 = vtanh.pop %v419
      %v427 = vmul.f32 %v425, %v357
      %429 = vrot.lane.b32.xlu0 %v426, 32
      %v430 = vpop.permute.xlu0 %429
      %v432 = vmul.f32 %v425, %v430
      %434 = vrot.lane.b32.xlu0 %v432, 32
      %v435 = vpop.permute.xlu0 %434
      %v437 = vadd.f32 %v427, %v435
      %v438 = vtanh.pop %v437
      %440 = vrot.lane.b32.xlu0 %v438, 32
      %v441 = vpop.permute.xlu0 %440
      %v443 = vmul.f32 %v425, %v441
      %445 = vrot.lane.b32.xlu0 %v443, 64
      %v446 = vpop.permute.xlu0 %445
      %s448 = scalar_lea.vmem %s181, 4
      %449 = vst.msk [vmem:[%s448] sm:$0x3] %vm288, %v446
      %s450 = scalar_lea.vmem %s171, 6
      %v451 = vld [vmem:[%s450] sm:$0x3]
      %v452 = vpack.c.bf16 %v443, %v443
      %454 = vrot.lane.b32.xlu0 %v452, 64
      %v455 = vpop.permute.xlu0 %454
      %v457 = vsel %vm211, %v455, 0
      %459 = vmatprep.subr.bf16.mxu0 0
      %460 = vmatpush1.bf16.msra.mxu0 %v207
      %461 = vmatprep.subr.bf16.mxu0 0
      %462 = vmatpush1.bf16.msra.mxu0 %v208
      %463 = vmatprep.subr.bf16.mxu0 0
      %464 = vmatpush1.bf16.msra.mxu0 0
      %465 = vmatprep.subr.bf16.mxu0 0
      %466 = vmatpush1.bf16.msra.mxu0 0
      %467 = vmatprep.subr.bf16.mxu0 0
      %468 = vmatpush1.bf16.msra.mxu0 0
      %469 = vmatprep.subr.bf16.mxu0 0
      %470 = vmatpush1.bf16.msra.mxu0 0
      %471 = vmatprep.subr.bf16.mxu0 0
      %472 = vmatpush1.bf16.msra.mxu0 0
      %473 = vmatprep.subr.bf16.mxu0 0
      %474 = vmatpush1.bf16.msra.mxu0 0
      %475 = vmatprep.subr.bf16.mxu0 0
      %476 = vmatpush1.bf16.msra.mxu0 0
      %477 = vmatprep.subr.bf16.mxu0 0
      %478 = vmatpush1.bf16.msra.mxu0 0
      %479 = vmatprep.subr.bf16.mxu0 0
      %480 = vmatpush1.bf16.msra.mxu0 0
      %481 = vmatprep.subr.bf16.mxu0 0
      %482 = vmatpush1.bf16.msra.mxu0 0
      %483 = vmatprep.subr.bf16.mxu0 0
      %484 = vmatpush1.bf16.msra.mxu0 0
      %485 = vmatprep.subr.bf16.mxu0 0
      %486 = vmatpush1.bf16.msra.mxu0 0
      %487 = vmatprep.subr.bf16.mxu0 0
      %488 = vmatpush1.bf16.msra.mxu0 0
      %489 = vmatprep.subr.bf16.mxu0 0
      %490 = vmatpush1.bf16.msra.mxu0 0
      %491 = vmatprep.mubr.bf16.mxu0 0
      %492 = vmatmul.mubr.bf16.gmra.mrb[0].mxu0 %v457
      %v493 = vpop.f32.mrb[0].mxu0
      %v494 = vadd.f32 0.0, %v493
      %v495 = vpop.f32.mrb[0].mxu0
      %v496 = vpop.f32.mrb[0].mxu0
      %v497 = vpop.f32.mrb[0].mxu0
      %498 = vdwg.mxu0
      %v499 = vadd.f32 %v451, %v494
      %v500 = vxor.u32 %v499, 2147483648
      %v501 = vmul.f32 %v500, 1.442695
      %v502 = vpow.pop %v501
      %v503 = vadd.f32 %v502, 1.0
      %v504 = vrcp.pop %v503
      %v505 = vmul.f32 1.0, %v504
      %v506 = vtanh.pop %v499
      %v507 = vmul.f32 %v505, %v437
      %509 = vrot.lane.b32.xlu0 %v506, 32
      %v510 = vpop.permute.xlu0 %509
      %v512 = vmul.f32 %v505, %v510
      %514 = vrot.lane.b32.xlu0 %v512, 32
      %v515 = vpop.permute.xlu0 %514
      %v517 = vadd.f32 %v507, %v515
      %v518 = vtanh.pop %v517
      %520 = vrot.lane.b32.xlu0 %v518, 32
      %v521 = vpop.permute.xlu0 %520
      %v523 = vmul.f32 %v505, %v521
      %525 = vrot.lane.b32.xlu0 %v523, 64
      %v526 = vpop.permute.xlu0 %525
      %s528 = scalar_lea.vmem %s181, 6
      %529 = vst.msk [vmem:[%s528] sm:$0x3] %vm288, %v526
      %s530 = scalar_lea.vmem %s171, 8
      %v531 = vld [vmem:[%s530] sm:$0x3]
      %v532 = vpack.c.bf16 %v523, %v523
      %534 = vrot.lane.b32.xlu0 %v532, 64
      %v535 = vpop.permute.xlu0 %534
      %v537 = vsel %vm211, %v535, 0
      %539 = vmatprep.subr.bf16.mxu0 0
      %540 = vmatpush1.bf16.msra.mxu0 %v207
      %541 = vmatprep.subr.bf16.mxu0 0
      %542 = vmatpush1.bf16.msra.mxu0 %v208
      %543 = vmatprep.subr.bf16.mxu0 0
      %544 = vmatpush1.bf16.msra.mxu0 0
      %545 = vmatprep.subr.bf16.mxu0 0
      %546 = vmatpush1.bf16.msra.mxu0 0
      %547 = vmatprep.subr.bf16.mxu0 0
      %548 = vmatpush1.bf16.msra.mxu0 0
      %549 = vmatprep.subr.bf16.mxu0 0
      %550 = vmatpush1.bf16.msra.mxu0 0
      %551 = vmatprep.subr.bf16.mxu0 0
      %552 = vmatpush1.bf16.msra.mxu0 0
      %553 = vmatprep.subr.bf16.mxu0 0
      %554 = vmatpush1.bf16.msra.mxu0 0
      %555 = vmatprep.subr.bf16.mxu0 0
      %556 = vmatpush1.bf16.msra.mxu0 0
      %557 = vmatprep.subr.bf16.mxu0 0
      %558 = vmatpush1.bf16.msra.mxu0 0
      %559 = vmatprep.subr.bf16.mxu0 0
      %560 = vmatpush1.bf16.msra.mxu0 0
      %561 = vmatprep.subr.bf16.mxu0 0
      %562 = vmatpush1.bf16.msra.mxu0 0
      %563 = vmatprep.subr.bf16.mxu0 0
      %564 = vmatpush1.bf16.msra.mxu0 0
      %565 = vmatprep.subr.bf16.mxu0 0
      %566 = vmatpush1.bf16.msra.mxu0 0
      %567 = vmatprep.subr.bf16.mxu0 0
      %568 = vmatpush1.bf16.msra.mxu0 0
      %569 = vmatprep.subr.bf16.mxu0 0
      %570 = vmatpush1.bf16.msra.mxu0 0
      %571 = vmatprep.mubr.bf16.mxu0 0
      %572 = vmatmul.mubr.bf16.gmra.mrb[0].mxu0 %v537
      %v573 = vpop.f32.mrb[0].mxu0
      %v574 = vadd.f32 0.0, %v573
      %v575 = vpop.f32.mrb[0].mxu0
      %v576 = vpop.f32.mrb[0].mxu0
      %v577 = vpop.f32.mrb[0].mxu0
      %578 = vdwg.mxu0
      %v579 = vadd.f32 %v531, %v574
      %v580 = vxor.u32 %v579, 2147483648
      %v581 = vmul.f32 %v580, 1.442695
      %v582 = vpow.pop %v581
      %v583 = vadd.f32 %v582, 1.0
      %v584 = vrcp.pop %v583
      %v585 = vmul.f32 1.0, %v584
      %v586 = vtanh.pop %v579
      %v587 = vmul.f32 %v585, %v517
      %589 = vrot.lane.b32.xlu0 %v586, 32
      %v590 = vpop.permute.xlu0 %589
      %v592 = vmul.f32 %v585, %v590
      %594 = vrot.lane.b32.xlu0 %v592, 32
      %v595 = vpop.permute.xlu0 %594
      %v597 = vadd.f32 %v587, %v595
      %v598 = vtanh.pop %v597
      %600 = vrot.lane.b32.xlu0 %v598, 32
      %v601 = vpop.permute.xlu0 %600
      %v603 = vmul.f32 %v585, %v601
      %605 = vrot.lane.b32.xlu0 %v603, 64
      %v606 = vpop.permute.xlu0 %605
      %s608 = scalar_lea.vmem %s181, 8
      %609 = vst.msk [vmem:[%s608] sm:$0x3] %vm288, %v606
      %s610 = scalar_lea.vmem %s171, 10
      %v611 = vld [vmem:[%s610] sm:$0x3]
      %v612 = vpack.c.bf16 %v603, %v603
      %614 = vrot.lane.b32.xlu0 %v612, 64
      %v615 = vpop.permute.xlu0 %614
      %v617 = vsel %vm211, %v615, 0
      %619 = vmatprep.subr.bf16.mxu0 0
      %620 = vmatpush1.bf16.msra.mxu0 %v207
      %621 = vmatprep.subr.bf16.mxu0 0
      %622 = vmatpush1.bf16.msra.mxu0 %v208
      %623 = vmatprep.subr.bf16.mxu0 0
      %624 = vmatpush1.bf16.msra.mxu0 0
      %625 = vmatprep.subr.bf16.mxu0 0
      %626 = vmatpush1.bf16.msra.mxu0 0
      %627 = vmatprep.subr.bf16.mxu0 0
      %628 = vmatpush1.bf16.msra.mxu0 0
      %629 = vmatprep.subr.bf16.mxu0 0
      %630 = vmatpush1.bf16.msra.mxu0 0
      %631 = vmatprep.subr.bf16.mxu0 0
      %632 = vmatpush1.bf16.msra.mxu0 0
      %633 = vmatprep.subr.bf16.mxu0 0
      %634 = vmatpush1.bf16.msra.mxu0 0
      %635 = vmatprep.subr.bf16.mxu0 0
      %636 = vmatpush1.bf16.msra.mxu0 0
      %637 = vmatprep.subr.bf16.mxu0 0
      %638 = vmatpush1.bf16.msra.mxu0 0
      %639 = vmatprep.subr.bf16.mxu0 0
      %640 = vmatpush1.bf16.msra.mxu0 0
      %641 = vmatprep.subr.bf16.mxu0 0
      %642 = vmatpush1.bf16.msra.mxu0 0
      %643 = vmatprep.subr.bf16.mxu0 0
      %644 = vmatpush1.bf16.msra.mxu0 0
      %645 = vmatprep.subr.bf16.mxu0 0
      %646 = vmatpush1.bf16.msra.mxu0 0
      %647 = vmatprep.subr.bf16.mxu0 0
      %648 = vmatpush1.bf16.msra.mxu0 0
      %649 = vmatprep.subr.bf16.mxu0 0
      %650 = vmatpush1.bf16.msra.mxu0 0
      %651 = vmatprep.mubr.bf16.mxu0 0
      %652 = vmatmul.mubr.bf16.gmra.mrb[0].mxu0 %v617
      %v653 = vpop.f32.mrb[0].mxu0
      %v654 = vadd.f32 0.0, %v653
      %v655 = vpop.f32.mrb[0].mxu0
      %v656 = vpop.f32.mrb[0].mxu0
      %v657 = vpop.f32.mrb[0].mxu0
      %658 = vdwg.mxu0
      %v659 = vadd.f32 %v611, %v654
      %v660 = vxor.u32 %v659, 2147483648
      %v661 = vmul.f32 %v660, 1.442695
      %v662 = vpow.pop %v661
      %v663 = vadd.f32 %v662, 1.0
      %v664 = vrcp.pop %v663
      %v665 = vmul.f32 1.0, %v664
      %v666 = vtanh.pop %v659
      %v667 = vmul.f32 %v665, %v597
      %669 = vrot.lane.b32.xlu0 %v666, 32
      %v670 = vpop.permute.xlu0 %669
      %v672 = vmul.f32 %v665, %v670
      %674 = vrot.lane.b32.xlu0 %v672, 32
      %v675 = vpop.permute.xlu0 %674
      %v677 = vadd.f32 %v667, %v675
      %v678 = vtanh.pop %v677
      %680 = vrot.lane.b32.xlu0 %v678, 32
      %v681 = vpop.permute.xlu0 %680
      %v683 = vmul.f32 %v665, %v681
      %685 = vrot.lane.b32.xlu0 %v683, 64
      %v686 = vpop.permute.xlu0 %685
      %s688 = scalar_lea.vmem %s181, 10
      %689 = vst.msk [vmem:[%s688] sm:$0x3] %vm288, %v686
      %s690 = scalar_lea.vmem %s171, 12
      %v691 = vld [vmem:[%s690] sm:$0x3]
      %v692 = vpack.c.bf16 %v683, %v683
      %694 = vrot.lane.b32.xlu0 %v692, 64
      %v695 = vpop.permute.xlu0 %694
      %v697 = vsel %vm211, %v695, 0
      %699 = vmatprep.subr.bf16.mxu0 0
      %700 = vmatpush1.bf16.msra.mxu0 %v207
      %701 = vmatprep.subr.bf16.mxu0 0
      %702 = vmatpush1.bf16.msra.mxu0 %v208
      %703 = vmatprep.subr.bf16.mxu0 0
      %704 = vmatpush1.bf16.msra.mxu0 0
      %705 = vmatprep.subr.bf16.mxu0 0
      %706 = vmatpush1.bf16.msra.mxu0 0
      %707 = vmatprep.subr.bf16.mxu0 0
      %708 = vmatpush1.bf16.msra.mxu0 0
      %709 = vmatprep.subr.bf16.mxu0 0
      %710 = vmatpush1.bf16.msra.mxu0 0
      %711 = vmatprep.subr.bf16.mxu0 0
      %712 = vmatpush1.bf16.msra.mxu0 0
      %713 = vmatprep.subr.bf16.mxu0 0
      %714 = vmatpush1.bf16.msra.mxu0 0
      %715 = vmatprep.subr.bf16.mxu0 0
      %716 = vmatpush1.bf16.msra.mxu0 0
      %717 = vmatprep.subr.bf16.mxu0 0
      %718 = vmatpush1.bf16.msra.mxu0 0
      %719 = vmatprep.subr.bf16.mxu0 0
      %720 = vmatpush1.bf16.msra.mxu0 0
      %721 = vmatprep.subr.bf16.mxu0 0
      %722 = vmatpush1.bf16.msra.mxu0 0
      %723 = vmatprep.subr.bf16.mxu0 0
      %724 = vmatpush1.bf16.msra.mxu0 0
      %725 = vmatprep.subr.bf16.mxu0 0
      %726 = vmatpush1.bf16.msra.mxu0 0
      %727 = vmatprep.subr.bf16.mxu0 0
      %728 = vmatpush1.bf16.msra.mxu0 0
      %729 = vmatprep.subr.bf16.mxu0 0
      %730 = vmatpush1.bf16.msra.mxu0 0
      %731 = vmatprep.mubr.bf16.mxu0 0
      %732 = vmatmul.mubr.bf16.gmra.mrb[0].mxu0 %v697
      %v733 = vpop.f32.mrb[0].mxu0
      %v734 = vadd.f32 0.0, %v733
      %v735 = vpop.f32.mrb[0].mxu0
      %v736 = vpop.f32.mrb[0].mxu0
      %v737 = vpop.f32.mrb[0].mxu0
      %738 = vdwg.mxu0
      %v739 = vadd.f32 %v691, %v734
      %v740 = vxor.u32 %v739, 2147483648
      %v741 = vmul.f32 %v740, 1.442695
      %v742 = vpow.pop %v741
      %v743 = vadd.f32 %v742, 1.0
      %v744 = vrcp.pop %v743
      %v745 = vmul.f32 1.0, %v744
      %v746 = vtanh.pop %v739
      %v747 = vmul.f32 %v745, %v677
      %749 = vrot.lane.b32.xlu0 %v746, 32
      %v750 = vpop.permute.xlu0 %749
      %v752 = vmul.f32 %v745, %v750
      %754 = vrot.lane.b32.xlu0 %v752, 32
      %v755 = vpop.permute.xlu0 %754
      %v757 = vadd.f32 %v747, %v755
      %v758 = vtanh.pop %v757
      %760 = vrot.lane.b32.xlu0 %v758, 32
      %v761 = vpop.permute.xlu0 %760
      %v763 = vmul.f32 %v745, %v761
      %765 = vrot.lane.b32.xlu0 %v763, 64
      %v766 = vpop.permute.xlu0 %765
      %s768 = scalar_lea.vmem %s181, 12
      %769 = vst.msk [vmem:[%s768] sm:$0x3] %vm288, %v766
      %s770 = scalar_lea.vmem %s171, 14
      %v771 = vld [vmem:[%s770] sm:$0x3]
      %v772 = vpack.c.bf16 %v763, %v763
      %774 = vrot.lane.b32.xlu0 %v772, 64
      %v775 = vpop.permute.xlu0 %774
      %v777 = vsel %vm211, %v775, 0
      %779 = vmatprep.subr.bf16.mxu0 0
      %780 = vmatpush1.bf16.msra.mxu0 %v207
      %781 = vmatprep.subr.bf16.mxu0 0
      %782 = vmatpush1.bf16.msra.mxu0 %v208
      %783 = vmatprep.subr.bf16.mxu0 0
      %784 = vmatpush1.bf16.msra.mxu0 0
      %785 = vmatprep.subr.bf16.mxu0 0
      %786 = vmatpush1.bf16.msra.mxu0 0
      %787 = vmatprep.subr.bf16.mxu0 0
      %788 = vmatpush1.bf16.msra.mxu0 0
      %789 = vmatprep.subr.bf16.mxu0 0
      %790 = vmatpush1.bf16.msra.mxu0 0
      %791 = vmatprep.subr.bf16.mxu0 0
      %792 = vmatpush1.bf16.msra.mxu0 0
      %793 = vmatprep.subr.bf16.mxu0 0
      %794 = vmatpush1.bf16.msra.mxu0 0
      %795 = vmatprep.subr.bf16.mxu0 0
      %796 = vmatpush1.bf16.msra.mxu0 0
      %797 = vmatprep.subr.bf16.mxu0 0
      %798 = vmatpush1.bf16.msra.mxu0 0
      %799 = vmatprep.subr.bf16.mxu0 0
      %800 = vmatpush1.bf16.msra.mxu0 0
      %801 = vmatprep.subr.bf16.mxu0 0
      %802 = vmatpush1.bf16.msra.mxu0 0
      %803 = vmatprep.subr.bf16.mxu0 0
      %804 = vmatpush1.bf16.msra.mxu0 0
      %805 = vmatprep.subr.bf16.mxu0 0
      %806 = vmatpush1.bf16.msra.mxu0 0
      %807 = vmatprep.subr.bf16.mxu0 0
      %808 = vmatpush1.bf16.msra.mxu0 0
      %809 = vmatprep.subr.bf16.mxu0 0
      %810 = vmatpush1.bf16.msra.mxu0 0
      %811 = vmatprep.mubr.bf16.mxu0 0
      %812 = vmatmul.mubr.bf16.gmra.mrb[0].mxu0 %v777
      %v813 = vpop.f32.mrb[0].mxu0
      %v814 = vadd.f32 0.0, %v813
      %v815 = vpop.f32.mrb[0].mxu0
      %v816 = vpop.f32.mrb[0].mxu0
      %v817 = vpop.f32.mrb[0].mxu0
      %818 = vdwg.mxu0
      %v819 = vadd.f32 %v771, %v814
      %v820 = vxor.u32 %v819, 2147483648
      %v821 = vmul.f32 %v820, 1.442695
      %v822 = vpow.pop %v821
      %v823 = vadd.f32 %v822, 1.0
      %v824 = vrcp.pop %v823
      %v825 = vmul.f32 1.0, %v824
      %v826 = vtanh.pop %v819
      %v827 = vmul.f32 %v825, %v757
      %829 = vrot.lane.b32.xlu0 %v826, 32
      %v830 = vpop.permute.xlu0 %829
      %v832 = vmul.f32 %v825, %v830
      %834 = vrot.lane.b32.xlu0 %v832, 32
      %v835 = vpop.permute.xlu0 %834
      %v837 = vadd.f32 %v827, %v835
      %v838 = vtanh.pop %v837
      %840 = vrot.lane.b32.xlu0 %v838, 32
      %v841 = vpop.permute.xlu0 %840
      %v843 = vmul.f32 %v825, %v841
      %845 = vrot.lane.b32.xlu0 %v843, 64
      %v846 = vpop.permute.xlu0 %845
      %s848 = scalar_lea.vmem %s181, 14
      %849 = vst.msk [vmem:[%s848] sm:$0x3] %vm288, %v846
      %850 = vst.msk [vmem:[#allocation2] sm:$0x3] %vm288, %v846
      %852 = vrot.lane.b32.xlu0 %v837, 96
      %v853 = vpop.permute.xlu0 %852
      %855 = vst.msk [vmem:[#allocation3] sm:$0x3] %vm288, %v853
      %s856 = smul.u32 8, %s18
      %p857 = scmp.lt.s32.totalorder %s17, 1
      %s858 = scalar_select %p857, %s17, 1
      %p859 = scmp.lt.s32.totalorder %s856, 15
      %s860 = scalar_select %p859, %s856, 15
      %s861 = smul.addr %s858, 16
      %s862 = sadd.s32 %s860, %s861
      %s863 = smul.addr %s862, 2
      %s864 = scalar_lea.vmem %s2, %s863
      // Predicated region
      $region33: #{encoder_forward.3} parent=27 // pred_check
        %p865 = pneg %p94
      $region34: #{encoder_forward.3} parent=27 // pred_check_branch
        %867 = sbr.rel (%p865) target = $region36
      $region35: #{encoder_forward.3} parent=27 // pred_region
        %s868 = smul.u32 8, %s18
      $region36: #{encoder_forward.3} parent=27 // pred_fallthru
        _
    $region28: #{encoder_forward.3} parent=5 // pred_fallthru
      _
    %p869 = scmp.le.s32.totalorder 2, %s8
    // Predicated region
    $region37: #{encoder_forward.3} parent=5 // pred_check
      %p870 = pneg %p869
    $region38: #{encoder_forward.3} parent=5 // pred_check_branch
      %872 = sbr.rel (%p870) target = $region40
    $region39: #{encoder_forward.3} parent=5 // pred_region
      %s873 = ssub.s32 %s8, 2
      // Predicated region
      $region41: #{encoder_forward.3} parent=39 // pred_check
        %p874 = pneg %p100
      $region42: #{encoder_forward.3} parent=39 // pred_check_branch
        %876 = sbr.rel (%p874) target = $region44
      $region43: #{encoder_forward.3} parent=39 // pred_region
        %s877 = smul.u32 8, %s20
        %p878 = scmp.lt.s32.totalorder %s19, 1
        %s879 = scalar_select %p878, %s19, 1
        %p880 = scmp.lt.s32.totalorder %s877, 15
        %s881 = scalar_select %p880, %s877, 15
        %s882 = smul.addr %s879, 16
        %s883 = sadd.s32 %s881, %s882
        %s884 = smul.addr %s883, 2
        %s885 = scalar_lea.vmem %s2, %s884
      $region44: #{encoder_forward.3} parent=39 // pred_fallthru
        _
    $region40: #{encoder_forward.3} parent=5 // pred_fallthru
      _
  $region6: #{encoder_forward.3} parent=0 // loop_footer
    %s12 = sadd.s32 1, %s8
  $region7: #{encoder_forward.3} parent=0 // loop_footer_branch
    %7 = sbr.rel target = $region3
  $region8: #{encoder_forward.3} parent=0 // loop_exit
    _

</llo_original>
